<compile_context>
chip_gen: v7x
topology: tpu7x:2x2x1
jax: 0.10.0
libtpu: 0.0.40
codegen_flags: <defaults>
</compile_context>

<pallas_src>
import functools

import jax
import jax.numpy as jnp
from jax.experimental import pallas as pl
from jax.experimental.pallas import tpu as pltpu


# Set to jnp.bfloat16 on v6e / v7x for ~2x MXU throughput (accumulation stays
# f32).  Default f32 preserves the exact PyTorch f32 numerics.
MXU_DTYPE = jnp.float32

_LANE = 128
_VMEM_LIMIT = 32 * 1024 * 1024  # explicit cap; safe on v5e/v6e (128 MiB) and v7x (64 MiB)


def _round_up(x, m):
    return (x + m - 1) // m * m


def _choose_k_tiling(k):
    """Pad K to a multiple of 128 and split into <=~1k-wide tiles (f32 acc kept in VMEM)."""
    kp = _round_up(k, _LANE)
    nk = max(1, -(-kp // 1024))
    tk = _round_up(-(-kp // nk), _LANE)
    return tk * nk, tk, nk


# ----------------------------------------------------------------------------
# Pallas kernels
# ----------------------------------------------------------------------------
def _conv_bn_relu_kernel(w_ref, a_ref, g_ref, b_ref, o_ref, acc_ref, *, eps, nvalid):
    """One K-tile of out = W @ A; on the last tile apply training-mode BN + ReLU."""
    k = pl.program_id(0)

    @pl.when(k == 0)
    def _init():
        acc_ref[...] = jnp.zeros_like(acc_ref)

    acc_ref[...] += jnp.dot(w_ref[...], a_ref[...],
                            preferred_element_type=jnp.float32)

    @pl.when(k == pl.num_programs(0) - 1)
    def _finalize():
        acc = acc_ref[...]                      # (Cout, Mp) f32, VMEM resident
        mp = acc.shape[1]
        inv_n = 1.0 / nvalid
        if nvalid != mp:                        # static branch: only if M was padded
            mask = jax.lax.broadcasted_iota(jnp.int32, acc.shape, 1) < nvalid
            acc_m = jnp.where(mask, acc, 0.0)
        else:
            acc_m = acc
        mean = jnp.sum(acc_m, axis=1, keepdims=True) * inv_n       # lane (XLU) reduce
        cent = acc - mean
        cent_m = jnp.where(mask, cent, 0.0) if nvalid != mp else cent
        var = jnp.sum(cent_m * cent_m, axis=1, keepdims=True) * inv_n
        scale = jax.lax.rsqrt(var + eps) * g_ref[...]
        o_ref[...] = jnp.maximum(cent * scale + b_ref[...], 0.0)


def _conv_bias_kernel(w_ref, a_ref, bias_ref, o_ref, acc_ref):
    """Plain conv GEMM; bias folded into the accumulator init (no extra add pass)."""
    k = pl.program_id(0)

    @pl.when(k == 0)
    def _init():
        acc_ref[...] = jnp.zeros_like(acc_ref) + bias_ref[...]

    acc_ref[...] += jnp.dot(w_ref[...], a_ref[...],
                            preferred_element_type=jnp.float32)

    @pl.when(k == pl.num_programs(0) - 1)
    def _finalize():
        o_ref[...] = acc_ref[...]


def _window_max_kernel(x_ref, o_ref):
    o_ref[...] = jnp.max(x_ref[...], axis=0, keepdims=True)


def _add_kernel(a_ref, b_ref, o_ref):
    o_ref[...] = a_ref[...] + b_ref[...]


# ----------------------------------------------------------------------------
# Conv wrappers (lane-dense transposed-im2col GEMM, fused epilogues)
# ----------------------------------------------------------------------------
def _conv_gemm_call(kernel_fn, w_t, a_t, small_ops, cout):
    """K-tiled lane-dense GEMM:  (Cout, K) @ (K, Mp) -> (Cout, Mp) with VMEM f32 acc."""
    _, K = w_t.shape
    _, M = a_t.shape
    k_pad, tk, nk = _choose_k_tiling(K)
    mp = _round_up(M, _LANE)
    w_t = jnp.pad(w_t.astype(MXU_DTYPE), ((0, 0), (0, k_pad - K)))
    a_t = jnp.pad(a_t.astype(MXU_DTYPE), ((0, k_pad - K), (0, mp - M)))

    small_specs = [pl.BlockSpec((cout, 1), lambda k: (0, 0)) for _ in small_ops]
    return pl.pallas_call(
        kernel_fn,
        out_shape=jax.ShapeDtypeStruct((cout, mp), jnp.float32),
        grid=(nk,),
        in_specs=[pl.BlockSpec((cout, tk), lambda k: (0, k)),
                  pl.BlockSpec((tk, mp), lambda k: (k, 0))] + small_specs,
        out_specs=pl.BlockSpec((cout, mp), lambda k: (0, 0)),
        scratch_shapes=[pltpu.VMEM((cout, mp), jnp.float32)],
        compiler_params=pltpu.CompilerParams(
            dimension_semantics=("arbitrary",),      # K is a reduction axis
            vmem_limit_bytes=_VMEM_LIMIT),
    )(w_t, a_t, *small_ops)


def _im2col_T_cf(x_cf, ksize, padding):
    """x_cf: (C, N, D, H, W), stride 1 -> transposed patch matrix A (K, M).

    K is ordered (kd, kh, kw, ci) to match w.reshape(KD*KH*KW*Cin, Cout);
    M is ordered (n, d, h, w).  Built directly in (K, M) layout so no extra
    HBM transpose pass is needed before the GEMM.
    """
    C, N, D, H, W = x_cf.shape
    KD, KH, KW = ksize
    PD, PH, PW = padding
    xp = jnp.pad(x_cf, ((0, 0), (0, 0), (PD, PD), (PH, PH), (PW, PW)))
    cols = [xp[:, :, kd:kd + D, kh:kh + H, kw:kw + W]
            for kd in range(KD) for kh in range(KH) for kw in range(KW)]
    a = jnp.stack(cols, axis=0)                        # (T, C, N, D, H, W)
    m = N * D * H * W
    return a.reshape(KD * KH * KW * C, m), m


def conv3d_bn_relu_cf(x_cf, w, gamma, beta, ksize, padding, eps=1e-5):
    """conv3DBatchNormRelu (Conv3d bias=False + training-mode BN + ReLU), channels-first."""
    _, N, D, H, W = x_cf.shape
    cout = w.shape[-1]
    a_t, m = _im2col_T_cf(x_cf, ksize, padding)
    w_t = jnp.transpose(w.reshape(-1, cout))           # (Cout, K)
    g = gamma.reshape(cout, 1).astype(jnp.float32)
    b = beta.reshape(cout, 1).astype(jnp.float32)
    kernel = functools.partial(_conv_bn_relu_kernel, eps=eps, nvalid=m)
    out = _conv_gemm_call(kernel, w_t, a_t, (g, b), cout)
    return out[:, :m].reshape(cout, N, D, H, W)


def conv3d_bias_cf(x_cf, w, bias, ksize, padding):
    """Plain Conv3d with bias (conv_res), channels-first."""
    _, N, D, H, W = x_cf.shape
    cout = w.shape[-1]
    a_t, m = _im2col_T_cf(x_cf, ksize, padding)
    w_t = jnp.transpose(w.reshape(-1, cout))
    bias2 = bias.reshape(cout, 1).astype(jnp.float32)
    out = _conv_gemm_call(_conv_bias_kernel, w_t, a_t, (bias2,), cout)
    return out[:, :m].reshape(cout, N, D, H, W)


# ----------------------------------------------------------------------------
# MaxPool / upsample / residual add
# ----------------------------------------------------------------------------
def maxpool3d_to_cf(z, scale, tl=4096):
    """MaxPool3d(scale, scale) on NCDHW z -> pooled result in (C, N, Do, Ho, Wo)."""
    N, C, D, H, W = z.shape
    sd, sh, sw = scale
    do, ho, wo = D // sd, H // sh, W // sw
    # pool-window elements go to the sublane axis; everything else is lane-dense
    zr = z.reshape(N, C, do, sd, ho, sh, wo, sw)
    zr = zr.transpose(3, 5, 7, 1, 0, 2, 4, 6).reshape(sd * sh * sw, -1)
    P, L = zr.shape
    tl_ = tl if L % tl == 0 else L
    pooled = pl.pallas_call(
        _window_max_kernel,
        out_shape=jax.ShapeDtypeStruct((1, L), z.dtype),
        grid=(L // tl_,),
        in_specs=[pl.BlockSpec((P, tl_), lambda i: (0, i))],
        out_specs=pl.BlockSpec((1, tl_), lambda i: (0, i)),
        compiler_params=pltpu.CompilerParams(dimension_semantics=("parallel",)),
    )(zr)
    return pooled.reshape(C, N, do, ho, wo)


def upsample_nearest_ncdhw(x, scale):
    """Nearest-neighbour upsample of NCDHW x by integer factors (broadcast, not gather)."""
    N, C, D, H, W = x.shape
    sd, sh, sw = scale
    x = jnp.broadcast_to(x[:, :, :, None, :, None, :, None],
                         (N, C, D, sd, H, sh, W, sw))
    return x.reshape(N, C, D * sd, H * sh, W * sw)


def pallas_add(a, b, tr=1024):
    """Elementwise a + b on a lane-dense (rows, 128) view (unmasked full-lane stores)."""
    shape, n = a.shape, a.size
    if n % _LANE == 0:
        a2, b2 = a.reshape(-1, _LANE), b.reshape(-1, _LANE)
    else:
        a2, b2 = a.reshape(1, n), b.reshape(1, n)
    R, Ccols = a2.shape
    if R % tr != 0:
        tr = R
    out = pl.pallas_call(
        _add_kernel,
        out_shape=jax.ShapeDtypeStruct((R, Ccols), a.dtype),
        grid=(R // tr,),
        in_specs=[pl.BlockSpec((tr, Ccols), lambda i: (i, 0))] * 2,
        out_specs=pl.BlockSpec((tr, Ccols), lambda i: (i, 0)),
        compiler_params=pltpu.CompilerParams(dimension_semantics=("parallel",)),
    )(a2, b2)
    return out.reshape(shape)


# ----------------------------------------------------------------------------
# FRRU forward (concat_method='Stack')
# ----------------------------------------------------------------------------
def frru_forward(y, z, params, scale, eps=1e-5):
    """FRRU forward pass; y and z are NCDHW exactly like the PyTorch module."""
    # x = cat([y, MaxPool3d(scale, scale)(z)], channel axis) -- channels-first
    pooled_cf = maxpool3d_to_cf(z, scale)                    # (Cres,  N, Dy, Hy, Wy)
    y_cf = jnp.transpose(y, (1, 0, 2, 3, 4))                 # (Cprev, N, Dy, Hy, Wy)
    x_cf = jnp.concatenate([y_cf, pooled_cf], axis=0)

    # y' = conv2(conv1(x)); each = Conv3d(19,3,3, bias=False) + BN + ReLU (fused)
    y1_cf = conv3d_bn_relu_cf(x_cf, params["w1"], params["g1"], params["b1"],
                              (19, 3, 3), (9, 1, 1), eps)
    y2_cf = conv3d_bn_relu_cf(y1_cf, params["w2"], params["g2"], params["b2"],
                              (19, 3, 3), (9, 1, 1), eps)

    # x = conv_res(y')  (Conv3d(19,1,1) with bias)
    xr_cf = conv3d_bias_cf(y2_cf, params["wres"], params["bres"],
                           (19, 1, 1), (9, 0, 0))

    # z' = z + nearest_upsample(x, scale)
    xr = jnp.transpose(xr_cf, (1, 0, 2, 3, 4))               # back to NCDHW
    xu = upsample_nearest_ncdhw(xr, scale)
    z_prime = pallas_add(z, xu)

    y_prime = jnp.transpose(y2_cf, (1, 0, 2, 3, 4))          # NCDHW
    return y_prime, z_prime


# ----------------------------------------------------------------------------
# main
# ----------------------------------------------------------------------------
if __name__ == "__main__":
    prev_channels = 4
    out_channels = 8
    residual_channels = 4
    scale = (1, 2, 2)

    N, Dz, Hz, Wz = 1, 8, 16, 16
    Dy, Hy, Wy = Dz // scale[0], Hz // scale[1], Wz // scale[2]

    key = jax.random.PRNGKey(0)
    k = jax.random.split(key, 10)

    # deterministic synthetic parameters (shapes follow FRRU.__init__)
    # conv weights stored as (KD, KH, KW, Cin, Cout)
    params = {
        "w1": 0.05 * jax.random.normal(
            k[0], (19, 3, 3, prev_channels + residual_channels, out_channels),
            jnp.float32),
        "g1": 1.0 + 0.1 * jax.random.normal(k[1], (out_channels,), jnp.float32),
        "b1": 0.1 * jax.random.normal(k[2], (out_channels,), jnp.float32),
        "w2": 0.05 * jax.random.normal(
            k[3], (19, 3, 3, out_channels, out_channels), jnp.float32),
        "g2": 1.0 + 0.1 * jax.random.normal(k[4], (out_channels,), jnp.float32),
        "b2": 0.1 * jax.random.normal(k[5], (out_channels,), jnp.float32),
        "wres": 0.05 * jax.random.normal(
            k[6], (19, 1, 1, out_channels, residual_channels), jnp.float32),
        "bres": 0.1 * jax.random.normal(k[7], (residual_channels,), jnp.float32),
    }

    # inputs (NCDHW, like PyTorch): y at pooled resolution, z at full resolution
    y = jax.random.normal(k[8], (N, prev_channels, Dy, Hy, Wy), jnp.float32)
    z = jax.random.normal(k[9], (N, residual_channels, Dz, Hz, Wz), jnp.float32)

    y_prime, z_prime = jax.jit(
        functools.partial(frru_forward, scale=scale))(y, z, params)
    jax.block_until_ready((y_prime, z_prime))

    assert y_prime.shape == (N, out_channels, Dy, Hy, Wy)
    assert z_prime.shape == (N, residual_channels, Dz, Hz, Wz)
    assert bool(jnp.all(jnp.isfinite(y_prime)))
    assert bool(jnp.all(jnp.isfinite(z_prime)))
    print("KERNEL_OK")
</pallas_src>

<mosaic_0001>
module attributes {stable_mosaic.version = 11 : i64} {
  func.func @_window_max_kernel(%arg0: i32, %arg1: memref<4x2048xf32, #tpu.memory_space<vmem>>, %arg2: memref<1x2048xf32, #tpu.memory_space<vmem>>) attributes {dimension_semantics = [#tpu.dimension_semantics<parallel>], iteration_bounds = array<i64: 1>, scalar_prefetch = 0 : i64, scratch_operands = 0 : i64, tpu.core_type = #tpu.core_type<tc>, window_params = [{transform_indices = @transform_0, window_bounds = array<i64: 4, 2048>}, {transform_indices = @transform_1, window_bounds = array<i64: 1, 2048>}]} {
    %c0 = arith.constant 0 : index
    %c0_0 = arith.constant 0 : index
    %0 = vector.load %arg1[%c0, %c0_0] : memref<4x2048xf32, #tpu.memory_space<vmem>>, vector<4x2048xf32>
    %cst = arith.constant dense<0xFF800000> : vector<2048xf32>
    %1 = vector.multi_reduction <maximumf>, %0, %cst [0] : vector<4x2048xf32> to vector<2048xf32>
    %2 = vector.shape_cast %1 : vector<2048xf32> to vector<1x2048xf32>
    %c0_1 = arith.constant 0 : index
    %c0_2 = arith.constant 0 : index
    %3 = vector.load %arg2[%c0_1, %c0_2] : memref<1x2048xf32, #tpu.memory_space<vmem>>, vector<1x2048xf32>
    tpu.vector_store %arg2[%c0_1, %c0_2], %2 {strides = array<i32>} : memref<1x2048xf32, #tpu.memory_space<vmem>>, vector<1x2048xf32>,
    return
  }
  func.func @transform_0(%arg0: i32) -> (i32, i32) {
    %c0_i32 = arith.constant 0 : i32
    %c0_i32_0 = arith.constant 0 : i32
    return %c0_i32, %arg0 : i32, i32
  }
  func.func @transform_1(%arg0: i32) -> (i32, i32) {
    %c0_i32 = arith.constant 0 : i32
    %c0_i32_0 = arith.constant 0 : i32
    return %c0_i32, %arg0 : i32, i32
  }
}

module attributes {stable_mosaic.version = 11 : i64} {
  func.func @_conv_bn_relu_kernel(%arg0: i32, %arg1: memref<8x768xf32, #tpu.memory_space<vmem>>, %arg2: memref<768x512xf32, #tpu.memory_space<vmem>>, %arg3: memref<8x1xf32, #tpu.memory_space<vmem>>, %arg4: memref<8x1xf32, #tpu.memory_space<vmem>>, %arg5: memref<8x512xf32, #tpu.memory_space<vmem>>, %arg6: memref<8x512xf32, #tpu.memory_space<vmem>>) attributes {dimension_semantics = [#tpu.dimension_semantics<arbitrary>], iteration_bounds = array<i64: 2>, scalar_prefetch = 0 : i64, scratch_operands = 1 : i64, tpu.core_type = #tpu.core_type<tc>, window_params = [{transform_indices = @transform_0, window_bounds = array<i64: 8, 768>}, {transform_indices = @transform_1, window_bounds = array<i64: 768, 512>}, {pipeline_mode = #tpu.pipeline_mode<synchronous>, transform_indices = @transform_2, window_bounds = array<i64: 8, 1>}, {pipeline_mode = #tpu.pipeline_mode<synchronous>, transform_indices = @transform_3, window_bounds = array<i64: 8, 1>}, {pipeline_mode = #tpu.pipeline_mode<synchronous>, transform_indices = @transform_4, window_bounds = array<i64: 8, 512>}]} {
    %c0_i32 = arith.constant 0 : i32
    %0 = arith.cmpi eq, %arg0, %c0_i32 : i32
    %1 = arith.extui %0 : i1 to i32
    %c0_i32_0 = arith.constant 0 : i32
    %2 = arith.cmpi ne, %1, %c0_i32_0 : i32
    scf.if %2 {
      %cst_9 = arith.constant 0.000000e+00 : f32
      %12 = vector.broadcast %cst_9 : f32 to vector<8x512xf32>
      %c0_10 = arith.constant 0 : index
      %c0_11 = arith.constant 0 : index
      %13 = vector.load %arg6[%c0_10, %c0_11] : memref<8x512xf32, #tpu.memory_space<vmem>>, vector<8x512xf32>
      tpu.vector_store %arg6[%c0_10, %c0_11], %12 {strides = array<i32>} : memref<8x512xf32, #tpu.memory_space<vmem>>, vector<8x512xf32>,
    } else {
    }
    %c0 = arith.constant 0 : index
    %c0_1 = arith.constant 0 : index
    %3 = vector.load %arg6[%c0, %c0_1] : memref<8x512xf32, #tpu.memory_space<vmem>>, vector<8x512xf32>
    %c0_2 = arith.constant 0 : index
    %c0_3 = arith.constant 0 : index
    %4 = vector.load %arg1[%c0_2, %c0_3] : memref<8x768xf32, #tpu.memory_space<vmem>>, vector<8x768xf32>
    %c0_4 = arith.constant 0 : index
    %c0_5 = arith.constant 0 : index
    %5 = vector.load %arg2[%c0_4, %c0_5] : memref<768x512xf32, #tpu.memory_space<vmem>>, vector<768x512xf32>
    %cst = arith.constant dense<0.000000e+00> : vector<8x512xf32>
    %6 = tpu.matmul %4, %5, %cst {dimension_numbers = #tpu.dot_dimension_numbers<[1], [0], [0], [1], [0, 0, 1, 1], [], []>} : vector<8x768xf32>, vector<768x512xf32>, vector<8x512xf32> -> vector<8x512xf32>
    %7 = arith.addf %3, %6 : vector<8x512xf32>
    %c0_6 = arith.constant 0 : index
    %c0_7 = arith.constant 0 : index
    %8 = vector.load %arg6[%c0_6, %c0_7] : memref<8x512xf32, #tpu.memory_space<vmem>>, vector<8x512xf32>
    tpu.vector_store %arg6[%c0_6, %c0_7], %7 {strides = array<i32>} : memref<8x512xf32, #tpu.memory_space<vmem>>, vector<8x512xf32>,
    %c1_i32 = arith.constant 1 : i32
    %9 = arith.cmpi eq, %arg0, %c1_i32 : i32
    %10 = arith.extui %9 : i1 to i32
    %c0_i32_8 = arith.constant 0 : i32
    %11 = arith.cmpi ne, %10, %c0_i32_8 : i32
    scf.if %11 {
      %c0_9 = arith.constant 0 : index
      %c0_10 = arith.constant 0 : index
      %12 = vector.load %arg6[%c0_9, %c0_10] : memref<8x512xf32, #tpu.memory_space<vmem>>, vector<8x512xf32>
      %cst_11 = arith.constant dense<0.000000e+00> : vector<8xf32>
      %13 = vector.multi_reduction <add>, %12, %cst_11 [1] : vector<8x512xf32> to vector<8xf32>
      %14 = vector.shape_cast %13 : vector<8xf32> to vector<8x1xf32>
      %cst_12 = arith.constant 0.001953125 : f32
      %15 = vector.broadcast %cst_12 : f32 to vector<8x1xf32>
      %16 = arith.mulf %14, %15 : vector<8x1xf32>
      %17 = vector.broadcast %16 : vector<8x1xf32> to vector<8x512xf32>
      %18 = arith.subf %12, %17 : vector<8x512xf32>
      %19 = arith.mulf %18, %18 : vector<8x512xf32>
      %cst_13 = arith.constant dense<0.000000e+00> : vector<8xf32>
      %20 = vector.multi_reduction <add>, %19, %cst_13 [1] : vector<8x512xf32> to vector<8xf32>
      %21 = vector.shape_cast %20 : vector<8xf32> to vector<8x1xf32>
      %cst_14 = arith.constant 0.001953125 : f32
      %22 = vector.broadcast %cst_14 : f32 to vector<8x1xf32>
      %23 = arith.mulf %21, %22 : vector<8x1xf32>
      %cst_15 = arith.constant 9.99999974E-6 : f32
      %24 = vector.broadcast %cst_15 : f32 to vector<8x1xf32>
      %25 = arith.addf %23, %24 : vector<8x1xf32>
      %26 = math.rsqrt %25 : vector<8x1xf32>
      %c0_16 = arith.constant 0 : index
      %c0_17 = arith.constant 0 : index
      %27 = vector.load %arg3[%c0_16, %c0_17] : memref<8x1xf32, #tpu.memory_space<vmem>>, vector<8x1xf32>
      %28 = arith.mulf %26, %27 : vector<8x1xf32>
      %29 = vector.broadcast %28 : vector<8x1xf32> to vector<8x512xf32>
      %30 = arith.mulf %18, %29 : vector<8x512xf32>
      %c0_18 = arith.constant 0 : index
      %c0_19 = arith.constant 0 : index
      %31 = vector.load %arg4[%c0_18, %c0_19] : memref<8x1xf32, #tpu.memory_space<vmem>>, vector<8x1xf32>
      %32 = vector.broadcast %31 : vector<8x1xf32> to vector<8x512xf32>
      %33 = arith.addf %30, %32 : vector<8x512xf32>
      %cst_20 = arith.constant 0.000000e+00 : f32
      %34 = vector.broadcast %cst_20 : f32 to vector<8x512xf32>
      %35 = arith.maximumf %33, %34 : vector<8x512xf32>
      %c0_21 = arith.constant 0 : index
      %c0_22 = arith.constant 0 : index
      %36 = vector.load %arg5[%c0_21, %c0_22] : memref<8x512xf32, #tpu.memory_space<vmem>>, vector<8x512xf32>
      tpu.vector_store %arg5[%c0_21, %c0_22], %35 {strides = array<i32>} : memref<8x512xf32, #tpu.memory_space<vmem>>, vector<8x512xf32>,
    } else {
    }
    return
  }
  func.func @transform_0(%arg0: i32) -> (i32, i32) {
    %c0_i32 = arith.constant 0 : i32
    %c0_i32_0 = arith.constant 0 : i32
    return %c0_i32, %arg0 : i32, i32
  }
  func.func @transform_1(%arg0: i32) -> (i32, i32) {
    %c0_i32 = arith.constant 0 : i32
    %c0_i32_0 = arith.constant 0 : i32
    return %arg0, %c0_i32 : i32, i32
  }
  func.func @transform_2(%arg0: i32) -> (i32, i32) {
    %c0_i32 = arith.constant 0 : i32
    %c0_i32_0 = arith.constant 0 : i32
    %c0_i32_1 = arith.constant 0 : i32
    return %c0_i32, %c0_i32_0 : i32, i32
  }
  func.func @transform_3(%arg0: i32) -> (i32, i32) {
    %c0_i32 = arith.constant 0 : i32
    %c0_i32_0 = arith.constant 0 : i32
    %c0_i32_1 = arith.constant 0 : i32
    return %c0_i32, %c0_i32_0 : i32, i32
  }
  func.func @transform_4(%arg0: i32) -> (i32, i32) {
    %c0_i32 = arith.constant 0 : i32
    %c0_i32_0 = arith.constant 0 : i32
    %c0_i32_1 = arith.constant 0 : i32
    return %c0_i32, %c0_i32_0 : i32, i32
  }
}

module attributes {stable_mosaic.version = 11 : i64} {
  func.func @_conv_bias_kernel(%arg0: i32, %arg1: memref<4x256xf32, #tpu.memory_space<vmem>>, %arg2: memref<256x512xf32, #tpu.memory_space<vmem>>, %arg3: memref<4x1xf32, #tpu.memory_space<vmem>>, %arg4: memref<4x512xf32, #tpu.memory_space<vmem>>, %arg5: memref<4x512xf32, #tpu.memory_space<vmem>>) attributes {dimension_semantics = [#tpu.dimension_semantics<arbitrary>], iteration_bounds = array<i64: 1>, scalar_prefetch = 0 : i64, scratch_operands = 1 : i64, tpu.core_type = #tpu.core_type<tc>, window_params = [{transform_indices = @transform_0, window_bounds = array<i64: 4, 256>}, {transform_indices = @transform_1, window_bounds = array<i64: 256, 512>}, {pipeline_mode = #tpu.pipeline_mode<synchronous>, transform_indices = @transform_2, window_bounds = array<i64: 4, 1>}, {pipeline_mode = #tpu.pipeline_mode<synchronous>, transform_indices = @transform_3, window_bounds = array<i64: 4, 512>}]} {
    %c0_i32 = arith.constant 0 : i32
    %0 = arith.cmpi eq, %arg0, %c0_i32 : i32
    %1 = arith.extui %0 : i1 to i32
    %c0_i32_0 = arith.constant 0 : i32
    %2 = arith.cmpi ne, %1, %c0_i32_0 : i32
    scf.if %2 {
      %cst_10 = arith.constant 0.000000e+00 : f32
      %12 = vector.broadcast %cst_10 : f32 to vector<4x512xf32>
      %c0_11 = arith.constant 0 : index
      %c0_12 = arith.constant 0 : index
      %13 = vector.load %arg3[%c0_11, %c0_12] : memref<4x1xf32, #tpu.memory_space<vmem>>, vector<4x1xf32>
      %14 = vector.broadcast %13 : vector<4x1xf32> to vector<4x512xf32>
      %15 = arith.addf %12, %14 : vector<4x512xf32>
      %c0_13 = arith.constant 0 : index
      %c0_14 = arith.constant 0 : index
      %16 = vector.load %arg5[%c0_13, %c0_14] : memref<4x512xf32, #tpu.memory_space<vmem>>, vector<4x512xf32>
      tpu.vector_store %arg5[%c0_13, %c0_14], %15 {strides = array<i32>} : memref<4x512xf32, #tpu.memory_space<vmem>>, vector<4x512xf32>,
    } else {
    }
    %c0 = arith.constant 0 : index
    %c0_1 = arith.constant 0 : index
    %3 = vector.load %arg5[%c0, %c0_1] : memref<4x512xf32, #tpu.memory_space<vmem>>, vector<4x512xf32>
    %c0_2 = arith.constant 0 : index
    %c0_3 = arith.constant 0 : index
    %4 = vector.load %arg1[%c0_2, %c0_3] : memref<4x256xf32, #tpu.memory_space<vmem>>, vector<4x256xf32>
    %c0_4 = arith.constant 0 : index
    %c0_5 = arith.constant 0 : index
    %5 = vector.load %arg2[%c0_4, %c0_5] : memref<256x512xf32, #tpu.memory_space<vmem>>, vector<256x512xf32>
    %cst = arith.constant dense<0.000000e+00> : vector<4x512xf32>
    %6 = tpu.matmul %4, %5, %cst {dimension_numbers = #tpu.dot_dimension_numbers<[1], [0], [0], [1], [0, 0, 1, 1], [], []>} : vector<4x256xf32>, vector<256x512xf32>, vector<4x512xf32> -> vector<4x512xf32>
    %7 = arith.addf %3, %6 : vector<4x512xf32>
    %c0_6 = arith.constant 0 : index
    %c0_7 = arith.constant 0 : index
    %8 = vector.load %arg5[%c0_6, %c0_7] : memref<4x512xf32, #tpu.memory_space<vmem>>, vector<4x512xf32>
    tpu.vector_store %arg5[%c0_6, %c0_7], %7 {strides = array<i32>} : memref<4x512xf32, #tpu.memory_space<vmem>>, vector<4x512xf32>,
    %c0_i32_8 = arith.constant 0 : i32
    %9 = arith.cmpi eq, %arg0, %c0_i32_8 : i32
    %10 = arith.extui %9 : i1 to i32
    %c0_i32_9 = arith.constant 0 : i32
    %11 = arith.cmpi ne, %10, %c0_i32_9 : i32
    scf.if %11 {
      %c0_10 = arith.constant 0 : index
      %c0_11 = arith.constant 0 : index
      %12 = vector.load %arg5[%c0_10, %c0_11] : memref<4x512xf32, #tpu.memory_space<vmem>>, vector<4x512xf32>
      %c0_12 = arith.constant 0 : index
      %c0_13 = arith.constant 0 : index
      %13 = vector.load %arg4[%c0_12, %c0_13] : memref<4x512xf32, #tpu.memory_space<vmem>>, vector<4x512xf32>
      tpu.vector_store %arg4[%c0_12, %c0_13], %12 {strides = array<i32>} : memref<4x512xf32, #tpu.memory_space<vmem>>, vector<4x512xf32>,
    } else {
    }
    return
  }
  func.func @transform_0(%arg0: i32) -> (i32, i32) {
    %c0_i32 = arith.constant 0 : i32
    %c0_i32_0 = arith.constant 0 : i32
    return %c0_i32, %arg0 : i32, i32
  }
  func.func @transform_1(%arg0: i32) -> (i32, i32) {
    %c0_i32 = arith.constant 0 : i32
    %c0_i32_0 = arith.constant 0 : i32
    return %arg0, %c0_i32 : i32, i32
  }
  func.func @transform_2(%arg0: i32) -> (i32, i32) {
    %c0_i32 = arith.constant 0 : i32
    %c0_i32_0 = arith.constant 0 : i32
    %c0_i32_1 = arith.constant 0 : i32
    return %c0_i32, %c0_i32_0 : i32, i32
  }
  func.func @transform_3(%arg0: i32) -> (i32, i32) {
    %c0_i32 = arith.constant 0 : i32
    %c0_i32_0 = arith.constant 0 : i32
    %c0_i32_1 = arith.constant 0 : i32
    return %c0_i32, %c0_i32_0 : i32, i32
  }
}

module attributes {stable_mosaic.version = 11 : i64} {
  func.func @_add_kernel(%arg0: i32, %arg1: memref<64x128xf32, #tpu.memory_space<vmem>>, %arg2: memref<64x128xf32, #tpu.memory_space<vmem>>, %arg3: memref<64x128xf32, #tpu.memory_space<vmem>>) attributes {dimension_semantics = [#tpu.dimension_semantics<parallel>], iteration_bounds = array<i64: 1>, scalar_prefetch = 0 : i64, scratch_operands = 0 : i64, tpu.core_type = #tpu.core_type<tc>, window_params = [{transform_indices = @transform_0, window_bounds = array<i64: 64, 128>}, {transform_indices = @transform_1, window_bounds = array<i64: 64, 128>}, {transform_indices = @transform_2, window_bounds = array<i64: 64, 128>}]} {
    %c0 = arith.constant 0 : index
    %c0_0 = arith.constant 0 : index
    %0 = vector.load %arg1[%c0, %c0_0] : memref<64x128xf32, #tpu.memory_space<vmem>>, vector<64x128xf32>
    %c0_1 = arith.constant 0 : index
    %c0_2 = arith.constant 0 : index
    %1 = vector.load %arg2[%c0_1, %c0_2] : memref<64x128xf32, #tpu.memory_space<vmem>>, vector<64x128xf32>
    %2 = arith.addf %0, %1 : vector<64x128xf32>
    %c0_3 = arith.constant 0 : index
    %c0_4 = arith.constant 0 : index
    %3 = vector.load %arg3[%c0_3, %c0_4] : memref<64x128xf32, #tpu.memory_space<vmem>>, vector<64x128xf32>
    tpu.vector_store %arg3[%c0_3, %c0_4], %2 {strides = array<i32>} : memref<64x128xf32, #tpu.memory_space<vmem>>, vector<64x128xf32>,
    return
  }
  func.func @transform_0(%arg0: i32) -> (i32, i32) {
    %c0_i32 = arith.constant 0 : i32
    %c0_i32_0 = arith.constant 0 : i32
    return %arg0, %c0_i32 : i32, i32
  }
  func.func @transform_1(%arg0: i32) -> (i32, i32) {
    %c0_i32 = arith.constant 0 : i32
    %c0_i32_0 = arith.constant 0 : i32
    return %arg0, %c0_i32 : i32, i32
  }
  func.func @transform_2(%arg0: i32) -> (i32, i32) {
    %c0_i32 = arith.constant 0 : i32
    %c0_i32_0 = arith.constant 0 : i32
    return %arg0, %c0_i32 : i32, i32
  }
}

</mosaic_0001>

<llo_original>
// kernel: frru_forward.5
$region0: #{frru_forward.5}
  #allocation0 [shape = 'u32[]', space=smem, size = 0x4, offset = 0x4, fixed_abs, tag = 'smem constant byte address 0x4 - core index']
  #allocation1 [shape = 'u32[144,128]{1,0:T(1,128)}', space=vmem, size = 0x12000, scoped, tag = 'internal scratch']
  %s0 = inlined_call_operand.vmem [shape: f32[4,2048], index: 0, kind: input, shape index: {}]
  %s1 = inlined_call_operand.vmem [shape: f32[1,2048], index: 1, kind: output, shape index: {}]
  %s2 = sld [smem:[#allocation0]]
  $region14: #{frru_forward.5} parent=0
    _
  %s4 = ssub.s32 1, %s2
  %s5 = scalar_select 0, %s4, %s2
  // Predicated region
  $region2: #{frru_forward.5} parent=0 // pred_check
    _
  $region3: #{frru_forward.5} parent=0 // pred_check_branch
    %7 = sbr.rel (0) target = $region5
  $region4: #{frru_forward.5} parent=0 // pred_region
    _
  $region5: #{frru_forward.5} parent=0 // pred_fallthru
    _
  %v8 = vld [vmem:[%s0] sm:$0xff]
  %v9 = vld [vmem:[%s0 + $0x8] sm:$0xff]
  %v10 = vld [vmem:[%s0 + $0x10] sm:$0xff]
  %v11 = vld [vmem:[%s0 + $0x18] sm:$0xff]
  %v12 = vld [vmem:[%s0 + $0x20] sm:$0xff]
  %v13 = vld [vmem:[%s0 + $0x28] sm:$0xff]
  %v14 = vld [vmem:[%s0 + $0x30] sm:$0xff]
  %v15 = vld [vmem:[%s0 + $0x38] sm:$0xff]
  %v24 = vcombine.high %v8, %v8
  %v25 = vcombine.high %v9, %v9
  %v26 = vcombine.high %v10, %v10
  %v27 = vcombine.high %v11, %v11
  %v28 = vcombine.high %v12, %v12
  %v29 = vcombine.high %v13, %v13
  %v30 = vcombine.high %v14, %v14
  %v31 = vcombine.high %v15, %v15
  %vm40 = vcmask 1043456
  %v41 = vsel %vm40, %v8, -inf
  %v42 = vrot.slane %v41, 4
  %v43 = vmax.f32 %v41, %v42
  %v44 = vrot.slane %v43, 2
  %v45 = vmax.f32 %v43, %v44
  %v46 = vrot.slane %v45, 1
  %v47 = vmax.f32 %v45, %v46
  %v48 = vsel %vm40, %v24, -inf
  %v49 = vrot.slane %v48, 4
  %v50 = vmax.f32 %v48, %v49
  %v51 = vrot.slane %v50, 2
  %v52 = vmax.f32 %v50, %v51
  %v53 = vrot.slane %v52, 1
  %v54 = vmax.f32 %v52, %v53
  %v55 = vsel %vm40, %v9, -inf
  %v56 = vrot.slane %v55, 4
  %v57 = vmax.f32 %v55, %v56
  %v58 = vrot.slane %v57, 2
  %v59 = vmax.f32 %v57, %v58
  %v60 = vrot.slane %v59, 1
  %v61 = vmax.f32 %v59, %v60
  %v62 = vsel %vm40, %v25, -inf
  %v63 = vrot.slane %v62, 4
  %v64 = vmax.f32 %v62, %v63
  %v65 = vrot.slane %v64, 2
  %v66 = vmax.f32 %v64, %v65
  %v67 = vrot.slane %v66, 1
  %v68 = vmax.f32 %v66, %v67
  %v69 = vsel %vm40, %v10, -inf
  %v70 = vrot.slane %v69, 4
  %v71 = vmax.f32 %v69, %v70
  %v72 = vrot.slane %v71, 2
  %v73 = vmax.f32 %v71, %v72
  %v74 = vrot.slane %v73, 1
  %v75 = vmax.f32 %v73, %v74
  %v76 = vsel %vm40, %v26, -inf
  %v77 = vrot.slane %v76, 4
  %v78 = vmax.f32 %v76, %v77
  %v79 = vrot.slane %v78, 2
  %v80 = vmax.f32 %v78, %v79
  %v81 = vrot.slane %v80, 1
  %v82 = vmax.f32 %v80, %v81
  %v83 = vsel %vm40, %v11, -inf
  %v84 = vrot.slane %v83, 4
  %v85 = vmax.f32 %v83, %v84
  %v86 = vrot.slane %v85, 2
  %v87 = vmax.f32 %v85, %v86
  %v88 = vrot.slane %v87, 1
  %v89 = vmax.f32 %v87, %v88
  %v90 = vsel %vm40, %v27, -inf
  %v91 = vrot.slane %v90, 4
  %v92 = vmax.f32 %v90, %v91
  %v93 = vrot.slane %v92, 2
  %v94 = vmax.f32 %v92, %v93
  %v95 = vrot.slane %v94, 1
  %v96 = vmax.f32 %v94, %v95
  %v97 = vsel %vm40, %v12, -inf
  %v98 = vrot.slane %v97, 4
  %v99 = vmax.f32 %v97, %v98
  %v100 = vrot.slane %v99, 2
  %v101 = vmax.f32 %v99, %v100
  %v102 = vrot.slane %v101, 1
  %v103 = vmax.f32 %v101, %v102
  %v104 = vsel %vm40, %v28, -inf
  %v105 = vrot.slane %v104, 4
  %v106 = vmax.f32 %v104, %v105
  %v107 = vrot.slane %v106, 2
  %v108 = vmax.f32 %v106, %v107
  %v109 = vrot.slane %v108, 1
  %v110 = vmax.f32 %v108, %v109
  %v111 = vsel %vm40, %v13, -inf
  %v112 = vrot.slane %v111, 4
  %v113 = vmax.f32 %v111, %v112
  %v114 = vrot.slane %v113, 2
  %v115 = vmax.f32 %v113, %v114
  %v116 = vrot.slane %v115, 1
  %v117 = vmax.f32 %v115, %v116
  %v118 = vsel %vm40, %v29, -inf
  %v119 = vrot.slane %v118, 4
  %v120 = vmax.f32 %v118, %v119
  %v121 = vrot.slane %v120, 2
  %v122 = vmax.f32 %v120, %v121
  %v123 = vrot.slane %v122, 1
  %v124 = vmax.f32 %v122, %v123
  %v125 = vsel %vm40, %v14, -inf
  %v126 = vrot.slane %v125, 4
  %v127 = vmax.f32 %v125, %v126
  %v128 = vrot.slane %v127, 2
  %v129 = vmax.f32 %v127, %v128
  %v130 = vrot.slane %v129, 1
  %v131 = vmax.f32 %v129, %v130
  %v132 = vsel %vm40, %v30, -inf
  %v133 = vrot.slane %v132, 4
  %v134 = vmax.f32 %v132, %v133
  %v135 = vrot.slane %v134, 2
  %v136 = vmax.f32 %v134, %v135
  %v137 = vrot.slane %v136, 1
  %v138 = vmax.f32 %v136, %v137
  %v139 = vsel %vm40, %v15, -inf
  %v140 = vrot.slane %v139, 4
  %v141 = vmax.f32 %v139, %v140
  %v142 = vrot.slane %v141, 2
  %v143 = vmax.f32 %v141, %v142
  %v144 = vrot.slane %v143, 1
  %v145 = vmax.f32 %v143, %v144
  %v146 = vsel %vm40, %v31, -inf
  %v147 = vrot.slane %v146, 4
  %v148 = vmax.f32 %v146, %v147
  %v149 = vrot.slane %v148, 2
  %v150 = vmax.f32 %v148, %v149
  %v151 = vrot.slane %v150, 1
  %v152 = vmax.f32 %v150, %v151
  %v169 = vcombine.low %v47, %v54
  %v170 = vcombine.low %v61, %v68
  %v171 = vcombine.low %v75, %v82
  %v172 = vcombine.low %v89, %v96
  %v174 = vunpack.c.l.s4 1966171168
  %v175 = vunpack.c.0.s8 %v174
  %v176 = vlaneseq
  %v177 = vshrl.u32 %v176, 7
  %v178 = vsub.s32 %v175, %v177
  %v179 = vrot.slane %v169, %v178
  %v181 = vunpack.c.l.s4 1966171168
  %v182 = vunpack.c.0.s8 %v181
  %v183 = vlaneseq
  %v184 = vshrl.u32 %v183, 7
  %v185 = vsub.s32 %v182, %v184
  %v186 = vrot.slane %v170, %v185
  %v188 = vunpack.c.l.s4 1966171168
  %v189 = vunpack.c.0.s8 %v188
  %v190 = vlaneseq
  %v191 = vshrl.u32 %v190, 7
  %v192 = vsub.s32 %v189, %v191
  %v193 = vrot.slane %v171, %v192
  %v195 = vunpack.c.l.s4 1966171168
  %v196 = vunpack.c.0.s8 %v195
  %v197 = vlaneseq
  %v198 = vshrl.u32 %v197, 7
  %v199 = vsub.s32 %v196, %v198
  %v200 = vrot.slane %v172, %v199
  %v201 = vcombine.low %v179, %v186
  %v202 = vcombine.low %v193, %v200
  %v204 = vunpack.c.l.s4 1966171168
  %v205 = vunpack.c.0.s8 %v204
  %v206 = vlaneseq
  %v207 = vshrl.u32 %v206, 7
  %v208 = vsub.s32 %v205, %v207
  %v209 = vrot.slane %v201, %v208
  %v211 = vunpack.c.l.s4 1966171168
  %v212 = vunpack.c.0.s8 %v211
  %v213 = vlaneseq
  %v214 = vshrl.u32 %v213, 7
  %v215 = vsub.s32 %v212, %v214
  %v216 = vrot.slane %v202, %v215
  %v217 = vcombine.low %v209, %v216
  %v218 = vcombine.low %v103, %v110
  %v219 = vcombine.low %v117, %v124
  %v220 = vcombine.low %v131, %v138
  %v221 = vcombine.low %v145, %v152
  %v223 = vunpack.c.l.s4 1966171168
  %v224 = vunpack.c.0.s8 %v223
  %v225 = vlaneseq
  %v226 = vshrl.u32 %v225, 7
  %v227 = vsub.s32 %v224, %v226
  %v228 = vrot.slane %v218, %v227
  %v230 = vunpack.c.l.s4 1966171168
  %v231 = vunpack.c.0.s8 %v230
  %v232 = vlaneseq
  %v233 = vshrl.u32 %v232, 7
  %v234 = vsub.s32 %v231, %v233
  %v235 = vrot.slane %v219, %v234
  %v237 = vunpack.c.l.s4 1966171168
  %v238 = vunpack.c.0.s8 %v237
  %v239 = vlaneseq
  %v240 = vshrl.u32 %v239, 7
  %v241 = vsub.s32 %v238, %v240
  %v242 = vrot.slane %v220, %v241
  %v244 = vunpack.c.l.s4 1966171168
  %v245 = vunpack.c.0.s8 %v244
  %v246 = vlaneseq
  %v247 = vshrl.u32 %v246, 7
  %v248 = vsub.s32 %v245, %v247
  %v249 = vrot.slane %v221, %v248
  %v250 = vcombine.low %v228, %v235
  %v251 = vcombine.low %v242, %v249
  %v253 = vunpack.c.l.s4 1966171168
  %v254 = vunpack.c.0.s8 %v253
  %v255 = vlaneseq
  %v256 = vshrl.u32 %v255, 7
  %v257 = vsub.s32 %v254, %v256
  %v258 = vrot.slane %v250, %v257
  %v260 = vunpack.c.l.s4 1966171168
  %v261 = vunpack.c.0.s8 %v260
  %v262 = vlaneseq
  %v263 = vshrl.u32 %v262, 7
  %v264 = vsub.s32 %v261, %v263
  %v265 = vrot.slane %v251, %v264
  %v266 = vcombine.low %v258, %v265
  %269 = vst [vmem:[%s1] sm:$0xff] %v217
  %270 = vst [vmem:[%s1 + $0x8] sm:$0xff] %v266
  // Predicated region
  $region6: #{frru_forward.5} parent=0 // pred_check
    _
  $region7: #{frru_forward.5} parent=0 // pred_check_branch
    %272 = sbr.rel (0) target = $region9
  $region8: #{frru_forward.5} parent=0 // pred_region
    _
  $region9: #{frru_forward.5} parent=0 // pred_fallthru
    _
  // Predicated region
  $region10: #{frru_forward.5} parent=0 // pred_check
    _
  $region11: #{frru_forward.5} parent=0 // pred_check_branch
    %274 = sbr.rel (0) target = $region13
  $region12: #{frru_forward.5} parent=0 // pred_region
    _
  $region13: #{frru_forward.5} parent=0 // pred_fallthru
    _

// kernel: frru_forward.6
$region0: #{frru_forward.6}
  #allocation0 [shape = 'u32[]', space=smem, size = 0x4, offset = 0x4, fixed_abs, tag = 'smem constant byte address 0x4 - core index']
  #allocation1 [shape = 'u32[144,128]{1,0:T(1,128)}', space=vmem, size = 0x12000, scoped, tag = 'internal scratch']
  #allocation2 [shape = 'f32[8,512]{1,0:T(8,128)}', space=vmem, size = 0x4000, scoped, tag = 'scratch operand']
  %s0 = inlined_call_operand.vmem [shape: f32[8,1536], index: 0, kind: input, shape index: {}]
  %s1 = inlined_call_operand.vmem [shape: f32[1536,512], index: 1, kind: input, shape index: {}]
  %s2 = inlined_call_operand.vmem [shape: f32[8,1], index: 2, kind: input, shape index: {}]
  %s3 = inlined_call_operand.vmem [shape: f32[8,1], index: 3, kind: input, shape index: {}]
  %s4 = inlined_call_operand.vmem [shape: f32[8,512], index: 4, kind: output, shape index: {}]
  %s5 = sld [smem:[#allocation0]]
  $region57: #{frru_forward.6} parent=0
    _
  %s7 = ssub.s32 1, %s5
  %s8 = scalar_select 0, %s7, %s5
  loop: start=0, step=1, limit=4
  $region2: #{frru_forward.6} parent=0 // loop_pre_header
    _
  $region3: #{frru_forward.6} parent=0 // loop_header
    %s10 = sphi 0, %s14
    %p11 = scmp.ge.s32.totalorder %s10, 4
    %s20 = sphi 0, %s22
    %s23 = sphi 0, %s20
    %s24 = sphi 0, %s23
    %s40 = sphi 0, %s24
    %s46 = sphi 0, %s48
    %s49 = sphi 0, %s46
    %s50 = sphi 0, %s49
    %s66 = sphi 0, %s50
    %s70 = sphi 0, %s70
    %s72 = sphi 0, %s70
    %s73 = sphi 0, %s72
    %s87 = sphi 0, %s73
    %s91 = sphi 0, %s91
    %s93 = sphi 0, %s91
    %s94 = sphi 0, %s93
    %s108 = sphi 0, %s94
    %s112 = sphi 0, %s112
    %s114 = sphi 0, %s112
    %s115 = sphi 0, %s114
    %s129 = sphi 0, %s115
  $region4: #{frru_forward.6} parent=0 // loop_header_branch
    %13 = sbr.rel (%p11) target = $region8
  $region5: #{frru_forward.6} parent=0 // loop_body
    %s15 = ssub.s32 %s10, 1
    %s16 = ssub.s32 %s10, 2
    %s17 = sadd.s32 %s10, 1
    %s18 = ssub.s32 %s10, %s17
    %p19 = scmp.eq.s32.totalorder %s18, 0
    %s21 = sadd.s32 %s20, 1
    %s22 = scalar_select %p19, %s20, %s21
    %p25 = pneg %p19
    %p26 = scmp.eq.s32.totalorder %s10, 1
    %p27 = por %p25, %p26
    %p28 = scmp.ne.s32.totalorder %s20, %s23
    %p29 = scmp.eq.s32.totalorder %s10, 0
    %p30 = por %p28, %p29
    %p31 = scmp.ne.s32.totalorder %s20, %s23
    %p32 = scmp.eq.s32.totalorder %s15, 1
    %p33 = por %p31, %p32
    %p34 = scmp.ne.s32.totalorder %s23, %s24
    %p35 = scmp.eq.s32.totalorder %s15, 0
    %p36 = por %p34, %p35
    %p37 = scmp.ne.s32.totalorder %s23, %s24
    %p38 = scmp.eq.s32.totalorder %s16, 1
    %p39 = por %p37, %p38
    %p41 = scmp.ne.s32.totalorder %s24, %s40
    %p42 = scmp.eq.s32.totalorder %s16, 0
    %p43 = por %p41, %p42
    %s44 = ssub.s32 %s10, %s17
    %p45 = scmp.eq.s32.totalorder %s44, 0
    %s47 = sadd.s32 %s46, 1
    %s48 = scalar_select %p45, %s46, %s47
    %p51 = pneg %p45
    %p52 = scmp.eq.s32.totalorder %s10, 1
    %p53 = por %p51, %p52
    %p54 = scmp.ne.s32.totalorder %s46, %s49
    %p55 = scmp.eq.s32.totalorder %s10, 0
    %p56 = por %p54, %p55
    %p57 = scmp.ne.s32.totalorder %s46, %s49
    %p58 = scmp.eq.s32.totalorder %s15, 1
    %p59 = por %p57, %p58
    %p60 = scmp.ne.s32.totalorder %s49, %s50
    %p61 = scmp.eq.s32.totalorder %s15, 0
    %p62 = por %p60, %p61
    %p63 = scmp.ne.s32.totalorder %s49, %s50
    %p64 = scmp.eq.s32.totalorder %s16, 1
    %p65 = por %p63, %p64
    %p67 = scmp.ne.s32.totalorder %s50, %s66
    %p68 = scmp.eq.s32.totalorder %s16, 0
    %p69 = por %p67, %p68
    %s71 = sadd.s32 %s70, 1
    %p74 = scmp.eq.s32.totalorder %s10, 1
    %p75 = scmp.ne.s32.totalorder %s70, %s72
    %p76 = scmp.eq.s32.totalorder %s10, 0
    %p77 = por %p75, %p76
    %p78 = scmp.ne.s32.totalorder %s70, %s72
    %p79 = scmp.eq.s32.totalorder %s15, 1
    %p80 = por %p78, %p79
    %p81 = scmp.ne.s32.totalorder %s72, %s73
    %p82 = scmp.eq.s32.totalorder %s15, 0
    %p83 = por %p81, %p82
    %p84 = scmp.ne.s32.totalorder %s72, %s73
    %p85 = scmp.eq.s32.totalorder %s16, 1
    %p86 = por %p84, %p85
    %p88 = scmp.ne.s32.totalorder %s73, %s87
    %p89 = scmp.eq.s32.totalorder %s16, 0
    %p90 = por %p88, %p89
    %s92 = sadd.s32 %s91, 1
    %p95 = scmp.eq.s32.totalorder %s10, 1
    %p96 = scmp.ne.s32.totalorder %s91, %s93
    %p97 = scmp.eq.s32.totalorder %s10, 0
    %p98 = por %p96, %p97
    %p99 = scmp.ne.s32.totalorder %s91, %s93
    %p100 = scmp.eq.s32.totalorder %s15, 1
    %p101 = por %p99, %p100
    %p102 = scmp.ne.s32.totalorder %s93, %s94
    %p103 = scmp.eq.s32.totalorder %s15, 0
    %p104 = por %p102, %p103
    %p105 = scmp.ne.s32.totalorder %s93, %s94
    %p106 = scmp.eq.s32.totalorder %s16, 1
    %p107 = por %p105, %p106
    %p109 = scmp.ne.s32.totalorder %s94, %s108
    %p110 = scmp.eq.s32.totalorder %s16, 0
    %p111 = por %p109, %p110
    %s113 = sadd.s32 %s112, 1
    %p116 = scmp.eq.s32.totalorder %s10, 1
    %p117 = scmp.ne.s32.totalorder %s112, %s114
    %p118 = scmp.eq.s32.totalorder %s10, 0
    %p119 = por %p117, %p118
    %p120 = scmp.ne.s32.totalorder %s112, %s114
    %p121 = scmp.eq.s32.totalorder %s15, 1
    %p122 = por %p120, %p121
    %p123 = scmp.ne.s32.totalorder %s114, %s115
    %p124 = scmp.eq.s32.totalorder %s15, 0
    %p125 = por %p123, %p124
    %p126 = scmp.ne.s32.totalorder %s114, %s115
    %p127 = scmp.eq.s32.totalorder %s16, 1
    %p128 = por %p126, %p127
    %p130 = scmp.ne.s32.totalorder %s115, %s129
    %p131 = scmp.eq.s32.totalorder %s16, 0
    %p132 = por %p130, %p131
    %p133 = scmp.le.s32.totalorder 1, %s10
    %p134 = scmp.lt.s32.totalorder %s10, 3
    %p135 = pnand %p133, %p134
    %p136 = pneg %p135
    // Predicated region
    $region9: #{frru_forward.6} parent=5 // pred_check
      _
    $region10: #{frru_forward.6} parent=5 // pred_check_branch
      %138 = sbr.rel (%p135) target = $region12
    $region11: #{frru_forward.6} parent=5 // pred_region
      %s139 = ssub.s32 %s10, 1
      // Predicated region
      $region13: #{frru_forward.6} parent=11 // pred_check
        %p140 = pneg %p83
      $region14: #{frru_forward.6} parent=11 // pred_check_branch
        %142 = sbr.rel (%p140) target = $region16
      $region15: #{frru_forward.6} parent=11 // pred_region
        _
      $region16: #{frru_forward.6} parent=11 // pred_fallthru
        _
      // Predicated region
      $region17: #{frru_forward.6} parent=11 // pred_check
        %p143 = pneg %p104
      $region18: #{frru_forward.6} parent=11 // pred_check_branch
        %145 = sbr.rel (%p143) target = $region20
      $region19: #{frru_forward.6} parent=11 // pred_region
        _
      $region20: #{frru_forward.6} parent=11 // pred_fallthru
        _
    $region12: #{frru_forward.6} parent=5 // pred_fallthru
      _
    %p146 = scmp.lt.s32.totalorder %s10, 2
    // Predicated region
    $region21: #{frru_forward.6} parent=5 // pred_check
      %p147 = pneg %p146
    $region22: #{frru_forward.6} parent=5 // pred_check_branch
      %149 = sbr.rel (%p147) target = $region24
    $region23: #{frru_forward.6} parent=5 // pred_region
      // Predicated region
      $region25: #{frru_forward.6} parent=23 // pred_check
        %p150 = pneg %p30
      $region26: #{frru_forward.6} parent=23 // pred_check_branch
        %152 = sbr.rel (%p150) target = $region28
      $region27: #{frru_forward.6} parent=23 // pred_region
        %s153 = smul.u32 6, %s10
        %p154 = scmp.lt.s32.totalorder %s153, 11
        %s155 = scalar_select %p154, %s153, 11
        %s156 = smul.addr %s155, 8
        %s157 = scalar_lea.vmem %s0, %s156
        %s158 = smul.u32 6, %s10
      $region28: #{frru_forward.6} parent=23 // pred_fallthru
        _
      // Predicated region
      $region29: #{frru_forward.6} parent=23 // pred_check
        %p159 = pneg %p56
      $region30: #{frru_forward.6} parent=23 // pred_check_branch
        %161 = sbr.rel (%p159) target = $region32
      $region31: #{frru_forward.6} parent=23 // pred_region
        %s162 = smul.u32 96, %s10
        %p163 = scmp.lt.s32.totalorder %s162, 191
        %s164 = scalar_select %p163, %s162, 191
        %s165 = smul.addr %s164, 4
        %s166 = smul.addr %s165, 8
        %s167 = scalar_lea.vmem %s1, %s166
        %s168 = smul.u32 96, %s10
      $region32: #{frru_forward.6} parent=23 // pred_fallthru
        _
    $region24: #{frru_forward.6} parent=5 // pred_fallthru
      _
    %p169 = scmp.le.s32.totalorder 1, %s10
    %p170 = scmp.lt.s32.totalorder %s10, 3
    %p171 = pnand %p169, %p170
    %p172 = pneg %p171
    // Predicated region
    $region33: #{frru_forward.6} parent=5 // pred_check
      _
    $region34: #{frru_forward.6} parent=5 // pred_check_branch
      %174 = sbr.rel (%p171) target = $region36
    $region35: #{frru_forward.6} parent=5 // pred_region
      %s175 = ssub.s32 %s10, 1
      %s176 = smul.u32 6, %s15
      %p177 = scmp.lt.s32.totalorder %s176, 11
      %s178 = scalar_select %p177, %s176, 11
      %s179 = smul.addr %s178, 8
      %s180 = scalar_lea.vmem %s0, %s179
      %p181 = pneg %p36
      %p182 = pneg %p33
      %s183 = smul.u32 96, %s15
      %p184 = scmp.lt.s32.totalorder %s183, 191
      %s185 = scalar_select %p184, %s183, 191
      %s186 = smul.addr %s185, 4
      %s187 = smul.addr %s186, 8
      %s188 = scalar_lea.vmem %s1, %s187
      %p189 = pneg %p62
      %p190 = pneg %p59
      %p191 = pneg %p83
      %p192 = pneg %p80
      %p193 = pneg %p104
      %p194 = pneg %p101
      %p195 = pneg %p125
      %p196 = pneg %p122
      %s197 = smul.u32 6, %s15
      %p198 = scmp.lt.s32.totalorder %s197, 11
      %s199 = scalar_select %p198, %s197, 11
      %s200 = smul.addr %s199, 8
      %s201 = scalar_lea.vmem %s0, %s200
      %s202 = smul.u32 6, %s15
      %s203 = smul.u32 96, %s15
      %p204 = scmp.lt.s32.totalorder %s203, 191
      %s205 = scalar_select %p204, %s203, 191
      %s206 = smul.addr %s205, 4
      %s207 = smul.addr %s206, 8
      %s208 = scalar_lea.vmem %s1, %s207
      %s209 = smul.u32 96, %s15
      %p210 = scmp.eq.s32.totalorder %s15, 0
      // Predicated region
      $region37: #{frru_forward.6} parent=35 // pred_check
        %p211 = pneg %p210
      $region38: #{frru_forward.6} parent=35 // pred_check_branch
        %213 = sbr.rel (%p211) target = $region40
      $region39: #{frru_forward.6} parent=35 // pred_region
        %214 = vst [vmem:[#allocation2] sm:$0xff] 0.0
        %215 = vst [vmem:[#allocation2 + $0x8] sm:$0xff] 0.0
        %216 = vst [vmem:[#allocation2 + $0x10] sm:$0xff] 0.0
        %217 = vst [vmem:[#allocation2 + $0x18] sm:$0xff] 0.0
      $region40: #{frru_forward.6} parent=35 // pred_fallthru
        _
      %v218 = vld [vmem:[#allocation2] sm:$0xff]
      %v219 = vld [vmem:[#allocation2 + $0x8] sm:$0xff]
      %v220 = vld [vmem:[#allocation2 + $0x10] sm:$0xff]
      %v221 = vld [vmem:[#allocation2 + $0x18] sm:$0xff]
      %v222 = vld [vmem:[%s201] sm:$0xff]
      %v223 = vld [vmem:[%s201 + $0x8] sm:$0xff]
      %v224 = vld [vmem:[%s201 + $0x10] sm:$0xff]
      %v225 = vld [vmem:[%s201 + $0x18] sm:$0xff]
      %v226 = vld [vmem:[%s201 + $0x20] sm:$0xff]
      %v227 = vld [vmem:[%s201 + $0x28] sm:$0xff]
      %v228 = vld [vmem:[%s208] sm:$0xff]
      %v229 = vld [vmem:[%s208 + $0x8] sm:$0xff]
      %v230 = vld [vmem:[%s208 + $0x10] sm:$0xff]
      %v231 = vld [vmem:[%s208 + $0x18] sm:$0xff]
      %v232 = vld [vmem:[%s208 + $0x20] sm:$0xff]
      %v233 = vld [vmem:[%s208 + $0x28] sm:$0xff]
      %v234 = vld [vmem:[%s208 + $0x30] sm:$0xff]
      %v235 = vld [vmem:[%s208 + $0x38] sm:$0xff]
      %v236 = vld [vmem:[%s208 + $0x40] sm:$0xff]
      %v237 = vld [vmem:[%s208 + $0x48] sm:$0xff]
      %v238 = vld [vmem:[%s208 + $0x50] sm:$0xff]
      %v239 = vld [vmem:[%s208 + $0x58] sm:$0xff]
      %v240 = vld [vmem:[%s208 + $0x60] sm:$0xff]
      %v241 = vld [vmem:[%s208 + $0x68] sm:$0xff]
      %v242 = vld [vmem:[%s208 + $0x70] sm:$0xff]
      %v243 = vld [vmem:[%s208 + $0x78] sm:$0xff]
      %v244 = vld [vmem:[%s208 + $0x80] sm:$0xff]
      %v245 = vld [vmem:[%s208 + $0x88] sm:$0xff]
      %v246 = vld [vmem:[%s208 + $0x90] sm:$0xff]
      %v247 = vld [vmem:[%s208 + $0x98] sm:$0xff]
      %v248 = vld [vmem:[%s208 + $0xa0] sm:$0xff]
      %v249 = vld [vmem:[%s208 + $0xa8] sm:$0xff]
      %v250 = vld [vmem:[%s208 + $0xb0] sm:$0xff]
      %v251 = vld [vmem:[%s208 + $0xb8] sm:$0xff]
      %v252 = vld [vmem:[%s208 + $0xc0] sm:$0xff]
      %v253 = vld [vmem:[%s208 + $0xc8] sm:$0xff]
      %v254 = vld [vmem:[%s208 + $0xd0] sm:$0xff]
      %v255 = vld [vmem:[%s208 + $0xd8] sm:$0xff]
      %v256 = vld [vmem:[%s208 + $0xe0] sm:$0xff]
      %v257 = vld [vmem:[%s208 + $0xe8] sm:$0xff]
      %v258 = vld [vmem:[%s208 + $0xf0] sm:$0xff]
      %v259 = vld [vmem:[%s208 + $0xf8] sm:$0xff]
      %v260 = vld [vmem:[%s208 + $0x100] sm:$0xff]
      %v261 = vld [vmem:[%s208 + $0x108] sm:$0xff]
      %v262 = vld [vmem:[%s208 + $0x110] sm:$0xff]
      %v263 = vld [vmem:[%s208 + $0x118] sm:$0xff]
      %v264 = vld [vmem:[%s208 + $0x120] sm:$0xff]
      %v265 = vld [vmem:[%s208 + $0x128] sm:$0xff]
      %v266 = vld [vmem:[%s208 + $0x130] sm:$0xff]
      %v267 = vld [vmem:[%s208 + $0x138] sm:$0xff]
      %v268 = vld [vmem:[%s208 + $0x140] sm:$0xff]
      %v269 = vld [vmem:[%s208 + $0x148] sm:$0xff]
      %v270 = vld [vmem:[%s208 + $0x150] sm:$0xff]
      %v271 = vld [vmem:[%s208 + $0x158] sm:$0xff]
      %v272 = vld [vmem:[%s208 + $0x160] sm:$0xff]
      %v273 = vld [vmem:[%s208 + $0x168] sm:$0xff]
      %v274 = vld [vmem:[%s208 + $0x170] sm:$0xff]
      %v275 = vld [vmem:[%s208 + $0x178] sm:$0xff]
      %v276 = vld [vmem:[%s208 + $0x180] sm:$0xff]
      %v277 = vld [vmem:[%s208 + $0x188] sm:$0xff]
      %v278 = vld [vmem:[%s208 + $0x190] sm:$0xff]
      %v279 = vld [vmem:[%s208 + $0x198] sm:$0xff]
      %v280 = vld [vmem:[%s208 + $0x1a0] sm:$0xff]
      %v281 = vld [vmem:[%s208 + $0x1a8] sm:$0xff]
      %v282 = vld [vmem:[%s208 + $0x1b0] sm:$0xff]
      %v283 = vld [vmem:[%s208 + $0x1b8] sm:$0xff]
      %v284 = vld [vmem:[%s208 + $0x1c0] sm:$0xff]
      %v285 = vld [vmem:[%s208 + $0x1c8] sm:$0xff]
      %v286 = vld [vmem:[%s208 + $0x1d0] sm:$0xff]
      %v287 = vld [vmem:[%s208 + $0x1d8] sm:$0xff]
      %v288 = vld [vmem:[%s208 + $0x1e0] sm:$0xff]
      %v289 = vld [vmem:[%s208 + $0x1e8] sm:$0xff]
      %v290 = vld [vmem:[%s208 + $0x1f0] sm:$0xff]
      %v291 = vld [vmem:[%s208 + $0x1f8] sm:$0xff]
      %v292 = vld [vmem:[%s208 + $0x200] sm:$0xff]
      %v293 = vld [vmem:[%s208 + $0x208] sm:$0xff]
      %v294 = vld [vmem:[%s208 + $0x210] sm:$0xff]
      %v295 = vld [vmem:[%s208 + $0x218] sm:$0xff]
      %v296 = vld [vmem:[%s208 + $0x220] sm:$0xff]
      %v297 = vld [vmem:[%s208 + $0x228] sm:$0xff]
      %v298 = vld [vmem:[%s208 + $0x230] sm:$0xff]
      %v299 = vld [vmem:[%s208 + $0x238] sm:$0xff]
      %v300 = vld [vmem:[%s208 + $0x240] sm:$0xff]
      %v301 = vld [vmem:[%s208 + $0x248] sm:$0xff]
      %v302 = vld [vmem:[%s208 + $0x250] sm:$0xff]
      %v303 = vld [vmem:[%s208 + $0x258] sm:$0xff]
      %v304 = vld [vmem:[%s208 + $0x260] sm:$0xff]
      %v305 = vld [vmem:[%s208 + $0x268] sm:$0xff]
      %v306 = vld [vmem:[%s208 + $0x270] sm:$0xff]
      %v307 = vld [vmem:[%s208 + $0x278] sm:$0xff]
      %v308 = vld [vmem:[%s208 + $0x280] sm:$0xff]
      %v309 = vld [vmem:[%s208 + $0x288] sm:$0xff]
      %v310 = vld [vmem:[%s208 + $0x290] sm:$0xff]
      %v311 = vld [vmem:[%s208 + $0x298] sm:$0xff]
      %v312 = vld [vmem:[%s208 + $0x2a0] sm:$0xff]
      %v313 = vld [vmem:[%s208 + $0x2a8] sm:$0xff]
      %v314 = vld [vmem:[%s208 + $0x2b0] sm:$0xff]
      %v315 = vld [vmem:[%s208 + $0x2b8] sm:$0xff]
      %v316 = vld [vmem:[%s208 + $0x2c0] sm:$0xff]
      %v317 = vld [vmem:[%s208 + $0x2c8] sm:$0xff]
      %v318 = vld [vmem:[%s208 + $0x2d0] sm:$0xff]
      %v319 = vld [vmem:[%s208 + $0x2d8] sm:$0xff]
      %v320 = vld [vmem:[%s208 + $0x2e0] sm:$0xff]
      %v321 = vld [vmem:[%s208 + $0x2e8] sm:$0xff]
      %v322 = vld [vmem:[%s208 + $0x2f0] sm:$0xff]
      %v323 = vld [vmem:[%s208 + $0x2f8] sm:$0xff]
      %v324 = vld [vmem:[%s208 + $0x300] sm:$0xff]
      %v325 = vld [vmem:[%s208 + $0x308] sm:$0xff]
      %v326 = vld [vmem:[%s208 + $0x310] sm:$0xff]
      %v327 = vld [vmem:[%s208 + $0x318] sm:$0xff]
      %v328 = vld [vmem:[%s208 + $0x320] sm:$0xff]
      %v329 = vld [vmem:[%s208 + $0x328] sm:$0xff]
      %v330 = vld [vmem:[%s208 + $0x330] sm:$0xff]
      %v331 = vld [vmem:[%s208 + $0x338] sm:$0xff]
      %v332 = vld [vmem:[%s208 + $0x340] sm:$0xff]
      %v333 = vld [vmem:[%s208 + $0x348] sm:$0xff]
      %v334 = vld [vmem:[%s208 + $0x350] sm:$0xff]
      %v335 = vld [vmem:[%s208 + $0x358] sm:$0xff]
      %v336 = vld [vmem:[%s208 + $0x360] sm:$0xff]
      %v337 = vld [vmem:[%s208 + $0x368] sm:$0xff]
      %v338 = vld [vmem:[%s208 + $0x370] sm:$0xff]
      %v339 = vld [vmem:[%s208 + $0x378] sm:$0xff]
      %v340 = vld [vmem:[%s208 + $0x380] sm:$0xff]
      %v341 = vld [vmem:[%s208 + $0x388] sm:$0xff]
      %v342 = vld [vmem:[%s208 + $0x390] sm:$0xff]
      %v343 = vld [vmem:[%s208 + $0x398] sm:$0xff]
      %v344 = vld [vmem:[%s208 + $0x3a0] sm:$0xff]
      %v345 = vld [vmem:[%s208 + $0x3a8] sm:$0xff]
      %v346 = vld [vmem:[%s208 + $0x3b0] sm:$0xff]
      %v347 = vld [vmem:[%s208 + $0x3b8] sm:$0xff]
      %v348 = vld [vmem:[%s208 + $0x3c0] sm:$0xff]
      %v349 = vld [vmem:[%s208 + $0x3c8] sm:$0xff]
      %v350 = vld [vmem:[%s208 + $0x3d0] sm:$0xff]
      %v351 = vld [vmem:[%s208 + $0x3d8] sm:$0xff]
      %v352 = vld [vmem:[%s208 + $0x3e0] sm:$0xff]
      %v353 = vld [vmem:[%s208 + $0x3e8] sm:$0xff]
      %v354 = vld [vmem:[%s208 + $0x3f0] sm:$0xff]
      %v355 = vld [vmem:[%s208 + $0x3f8] sm:$0xff]
      %v356 = vld [vmem:[%s208 + $0x400] sm:$0xff]
      %v357 = vld [vmem:[%s208 + $0x408] sm:$0xff]
      %v358 = vld [vmem:[%s208 + $0x410] sm:$0xff]
      %v359 = vld [vmem:[%s208 + $0x418] sm:$0xff]
      %v360 = vld [vmem:[%s208 + $0x420] sm:$0xff]
      %v361 = vld [vmem:[%s208 + $0x428] sm:$0xff]
      %v362 = vld [vmem:[%s208 + $0x430] sm:$0xff]
      %v363 = vld [vmem:[%s208 + $0x438] sm:$0xff]
      %v364 = vld [vmem:[%s208 + $0x440] sm:$0xff]
      %v365 = vld [vmem:[%s208 + $0x448] sm:$0xff]
      %v366 = vld [vmem:[%s208 + $0x450] sm:$0xff]
      %v367 = vld [vmem:[%s208 + $0x458] sm:$0xff]
      %v368 = vld [vmem:[%s208 + $0x460] sm:$0xff]
      %v369 = vld [vmem:[%s208 + $0x468] sm:$0xff]
      %v370 = vld [vmem:[%s208 + $0x470] sm:$0xff]
      %v371 = vld [vmem:[%s208 + $0x478] sm:$0xff]
      %v372 = vld [vmem:[%s208 + $0x480] sm:$0xff]
      %v373 = vld [vmem:[%s208 + $0x488] sm:$0xff]
      %v374 = vld [vmem:[%s208 + $0x490] sm:$0xff]
      %v375 = vld [vmem:[%s208 + $0x498] sm:$0xff]
      %v376 = vld [vmem:[%s208 + $0x4a0] sm:$0xff]
      %v377 = vld [vmem:[%s208 + $0x4a8] sm:$0xff]
      %v378 = vld [vmem:[%s208 + $0x4b0] sm:$0xff]
      %v379 = vld [vmem:[%s208 + $0x4b8] sm:$0xff]
      %v380 = vld [vmem:[%s208 + $0x4c0] sm:$0xff]
      %v381 = vld [vmem:[%s208 + $0x4c8] sm:$0xff]
      %v382 = vld [vmem:[%s208 + $0x4d0] sm:$0xff]
      %v383 = vld [vmem:[%s208 + $0x4d8] sm:$0xff]
      %v384 = vld [vmem:[%s208 + $0x4e0] sm:$0xff]
      %v385 = vld [vmem:[%s208 + $0x4e8] sm:$0xff]
      %v386 = vld [vmem:[%s208 + $0x4f0] sm:$0xff]
      %v387 = vld [vmem:[%s208 + $0x4f8] sm:$0xff]
      %v388 = vld [vmem:[%s208 + $0x500] sm:$0xff]
      %v389 = vld [vmem:[%s208 + $0x508] sm:$0xff]
      %v390 = vld [vmem:[%s208 + $0x510] sm:$0xff]
      %v391 = vld [vmem:[%s208 + $0x518] sm:$0xff]
      %v392 = vld [vmem:[%s208 + $0x520] sm:$0xff]
      %v393 = vld [vmem:[%s208 + $0x528] sm:$0xff]
      %v394 = vld [vmem:[%s208 + $0x530] sm:$0xff]
      %v395 = vld [vmem:[%s208 + $0x538] sm:$0xff]
      %v396 = vld [vmem:[%s208 + $0x540] sm:$0xff]
      %v397 = vld [vmem:[%s208 + $0x548] sm:$0xff]
      %v398 = vld [vmem:[%s208 + $0x550] sm:$0xff]
      %v399 = vld [vmem:[%s208 + $0x558] sm:$0xff]
      %v400 = vld [vmem:[%s208 + $0x560] sm:$0xff]
      %v401 = vld [vmem:[%s208 + $0x568] sm:$0xff]
      %v402 = vld [vmem:[%s208 + $0x570] sm:$0xff]
      %v403 = vld [vmem:[%s208 + $0x578] sm:$0xff]
      %v404 = vld [vmem:[%s208 + $0x580] sm:$0xff]
      %v405 = vld [vmem:[%s208 + $0x588] sm:$0xff]
      %v406 = vld [vmem:[%s208 + $0x590] sm:$0xff]
      %v407 = vld [vmem:[%s208 + $0x598] sm:$0xff]
      %v408 = vld [vmem:[%s208 + $0x5a0] sm:$0xff]
      %v409 = vld [vmem:[%s208 + $0x5a8] sm:$0xff]
      %v410 = vld [vmem:[%s208 + $0x5b0] sm:$0xff]
      %v411 = vld [vmem:[%s208 + $0x5b8] sm:$0xff]
      %v412 = vld [vmem:[%s208 + $0x5c0] sm:$0xff]
      %v413 = vld [vmem:[%s208 + $0x5c8] sm:$0xff]
      %v414 = vld [vmem:[%s208 + $0x5d0] sm:$0xff]
      %v415 = vld [vmem:[%s208 + $0x5d8] sm:$0xff]
      %v416 = vld [vmem:[%s208 + $0x5e0] sm:$0xff]
      %v417 = vld [vmem:[%s208 + $0x5e8] sm:$0xff]
      %v418 = vld [vmem:[%s208 + $0x5f0] sm:$0xff]
      %v419 = vld [vmem:[%s208 + $0x5f8] sm:$0xff]
      %v420 = vld [vmem:[%s208 + $0x600] sm:$0xff]
      %v421 = vld [vmem:[%s208 + $0x608] sm:$0xff]
      %v422 = vld [vmem:[%s208 + $0x610] sm:$0xff]
      %v423 = vld [vmem:[%s208 + $0x618] sm:$0xff]
      %v424 = vld [vmem:[%s208 + $0x620] sm:$0xff]
      %v425 = vld [vmem:[%s208 + $0x628] sm:$0xff]
      %v426 = vld [vmem:[%s208 + $0x630] sm:$0xff]
      %v427 = vld [vmem:[%s208 + $0x638] sm:$0xff]
      %v428 = vld [vmem:[%s208 + $0x640] sm:$0xff]
      %v429 = vld [vmem:[%s208 + $0x648] sm:$0xff]
      %v430 = vld [vmem:[%s208 + $0x650] sm:$0xff]
      %v431 = vld [vmem:[%s208 + $0x658] sm:$0xff]
      %v432 = vld [vmem:[%s208 + $0x660] sm:$0xff]
      %v433 = vld [vmem:[%s208 + $0x668] sm:$0xff]
      %v434 = vld [vmem:[%s208 + $0x670] sm:$0xff]
      %v435 = vld [vmem:[%s208 + $0x678] sm:$0xff]
      %v436 = vld [vmem:[%s208 + $0x680] sm:$0xff]
      %v437 = vld [vmem:[%s208 + $0x688] sm:$0xff]
      %v438 = vld [vmem:[%s208 + $0x690] sm:$0xff]
      %v439 = vld [vmem:[%s208 + $0x698] sm:$0xff]
      %v440 = vld [vmem:[%s208 + $0x6a0] sm:$0xff]
      %v441 = vld [vmem:[%s208 + $0x6a8] sm:$0xff]
      %v442 = vld [vmem:[%s208 + $0x6b0] sm:$0xff]
      %v443 = vld [vmem:[%s208 + $0x6b8] sm:$0xff]
      %v444 = vld [vmem:[%s208 + $0x6c0] sm:$0xff]
      %v445 = vld [vmem:[%s208 + $0x6c8] sm:$0xff]
      %v446 = vld [vmem:[%s208 + $0x6d0] sm:$0xff]
      %v447 = vld [vmem:[%s208 + $0x6d8] sm:$0xff]
      %v448 = vld [vmem:[%s208 + $0x6e0] sm:$0xff]
      %v449 = vld [vmem:[%s208 + $0x6e8] sm:$0xff]
      %v450 = vld [vmem:[%s208 + $0x6f0] sm:$0xff]
      %v451 = vld [vmem:[%s208 + $0x6f8] sm:$0xff]
      %v452 = vld [vmem:[%s208 + $0x700] sm:$0xff]
      %v453 = vld [vmem:[%s208 + $0x708] sm:$0xff]
      %v454 = vld [vmem:[%s208 + $0x710] sm:$0xff]
      %v455 = vld [vmem:[%s208 + $0x718] sm:$0xff]
      %v456 = vld [vmem:[%s208 + $0x720] sm:$0xff]
      %v457 = vld [vmem:[%s208 + $0x728] sm:$0xff]
      %v458 = vld [vmem:[%s208 + $0x730] sm:$0xff]
      %v459 = vld [vmem:[%s208 + $0x738] sm:$0xff]
      %v460 = vld [vmem:[%s208 + $0x740] sm:$0xff]
      %v461 = vld [vmem:[%s208 + $0x748] sm:$0xff]
      %v462 = vld [vmem:[%s208 + $0x750] sm:$0xff]
      %v463 = vld [vmem:[%s208 + $0x758] sm:$0xff]
      %v464 = vld [vmem:[%s208 + $0x760] sm:$0xff]
      %v465 = vld [vmem:[%s208 + $0x768] sm:$0xff]
      %v466 = vld [vmem:[%s208 + $0x770] sm:$0xff]
      %v467 = vld [vmem:[%s208 + $0x778] sm:$0xff]
      %v468 = vld [vmem:[%s208 + $0x780] sm:$0xff]
      %v469 = vld [vmem:[%s208 + $0x788] sm:$0xff]
      %v470 = vld [vmem:[%s208 + $0x790] sm:$0xff]
      %v471 = vld [vmem:[%s208 + $0x798] sm:$0xff]
      %v472 = vld [vmem:[%s208 + $0x7a0] sm:$0xff]
      %v473 = vld [vmem:[%s208 + $0x7a8] sm:$0xff]
      %v474 = vld [vmem:[%s208 + $0x7b0] sm:$0xff]
      %v475 = vld [vmem:[%s208 + $0x7b8] sm:$0xff]
      %v476 = vld [vmem:[%s208 + $0x7c0] sm:$0xff]
      %v477 = vld [vmem:[%s208 + $0x7c8] sm:$0xff]
      %v478 = vld [vmem:[%s208 + $0x7d0] sm:$0xff]
      %v479 = vld [vmem:[%s208 + $0x7d8] sm:$0xff]
      %v480 = vld [vmem:[%s208 + $0x7e0] sm:$0xff]
      %v481 = vld [vmem:[%s208 + $0x7e8] sm:$0xff]
      %v482 = vld [vmem:[%s208 + $0x7f0] sm:$0xff]
      %v483 = vld [vmem:[%s208 + $0x7f8] sm:$0xff]
      %v484 = vld [vmem:[%s208 + $0x800] sm:$0xff]
      %v485 = vld [vmem:[%s208 + $0x808] sm:$0xff]
      %v486 = vld [vmem:[%s208 + $0x810] sm:$0xff]
      %v487 = vld [vmem:[%s208 + $0x818] sm:$0xff]
      %v488 = vld [vmem:[%s208 + $0x820] sm:$0xff]
      %v489 = vld [vmem:[%s208 + $0x828] sm:$0xff]
      %v490 = vld [vmem:[%s208 + $0x830] sm:$0xff]
      %v491 = vld [vmem:[%s208 + $0x838] sm:$0xff]
      %v492 = vld [vmem:[%s208 + $0x840] sm:$0xff]
      %v493 = vld [vmem:[%s208 + $0x848] sm:$0xff]
      %v494 = vld [vmem:[%s208 + $0x850] sm:$0xff]
      %v495 = vld [vmem:[%s208 + $0x858] sm:$0xff]
      %v496 = vld [vmem:[%s208 + $0x860] sm:$0xff]
      %v497 = vld [vmem:[%s208 + $0x868] sm:$0xff]
      %v498 = vld [vmem:[%s208 + $0x870] sm:$0xff]
      %v499 = vld [vmem:[%s208 + $0x878] sm:$0xff]
      %v500 = vld [vmem:[%s208 + $0x880] sm:$0xff]
      %v501 = vld [vmem:[%s208 + $0x888] sm:$0xff]
      %v502 = vld [vmem:[%s208 + $0x890] sm:$0xff]
      %v503 = vld [vmem:[%s208 + $0x898] sm:$0xff]
      %v504 = vld [vmem:[%s208 + $0x8a0] sm:$0xff]
      %v505 = vld [vmem:[%s208 + $0x8a8] sm:$0xff]
      %v506 = vld [vmem:[%s208 + $0x8b0] sm:$0xff]
      %v507 = vld [vmem:[%s208 + $0x8b8] sm:$0xff]
      %v508 = vld [vmem:[%s208 + $0x8c0] sm:$0xff]
      %v509 = vld [vmem:[%s208 + $0x8c8] sm:$0xff]
      %v510 = vld [vmem:[%s208 + $0x8d0] sm:$0xff]
      %v511 = vld [vmem:[%s208 + $0x8d8] sm:$0xff]
      %v512 = vld [vmem:[%s208 + $0x8e0] sm:$0xff]
      %v513 = vld [vmem:[%s208 + $0x8e8] sm:$0xff]
      %v514 = vld [vmem:[%s208 + $0x8f0] sm:$0xff]
      %v515 = vld [vmem:[%s208 + $0x8f8] sm:$0xff]
      %v516 = vld [vmem:[%s208 + $0x900] sm:$0xff]
      %v517 = vld [vmem:[%s208 + $0x908] sm:$0xff]
      %v518 = vld [vmem:[%s208 + $0x910] sm:$0xff]
      %v519 = vld [vmem:[%s208 + $0x918] sm:$0xff]
      %v520 = vld [vmem:[%s208 + $0x920] sm:$0xff]
      %v521 = vld [vmem:[%s208 + $0x928] sm:$0xff]
      %v522 = vld [vmem:[%s208 + $0x930] sm:$0xff]
      %v523 = vld [vmem:[%s208 + $0x938] sm:$0xff]
      %v524 = vld [vmem:[%s208 + $0x940] sm:$0xff]
      %v525 = vld [vmem:[%s208 + $0x948] sm:$0xff]
      %v526 = vld [vmem:[%s208 + $0x950] sm:$0xff]
      %v527 = vld [vmem:[%s208 + $0x958] sm:$0xff]
      %v528 = vld [vmem:[%s208 + $0x960] sm:$0xff]
      %v529 = vld [vmem:[%s208 + $0x968] sm:$0xff]
      %v530 = vld [vmem:[%s208 + $0x970] sm:$0xff]
      %v531 = vld [vmem:[%s208 + $0x978] sm:$0xff]
      %v532 = vld [vmem:[%s208 + $0x980] sm:$0xff]
      %v533 = vld [vmem:[%s208 + $0x988] sm:$0xff]
      %v534 = vld [vmem:[%s208 + $0x990] sm:$0xff]
      %v535 = vld [vmem:[%s208 + $0x998] sm:$0xff]
      %v536 = vld [vmem:[%s208 + $0x9a0] sm:$0xff]
      %v537 = vld [vmem:[%s208 + $0x9a8] sm:$0xff]
      %v538 = vld [vmem:[%s208 + $0x9b0] sm:$0xff]
      %v539 = vld [vmem:[%s208 + $0x9b8] sm:$0xff]
      %v540 = vld [vmem:[%s208 + $0x9c0] sm:$0xff]
      %v541 = vld [vmem:[%s208 + $0x9c8] sm:$0xff]
      %v542 = vld [vmem:[%s208 + $0x9d0] sm:$0xff]
      %v543 = vld [vmem:[%s208 + $0x9d8] sm:$0xff]
      %v544 = vld [vmem:[%s208 + $0x9e0] sm:$0xff]
      %v545 = vld [vmem:[%s208 + $0x9e8] sm:$0xff]
      %v546 = vld [vmem:[%s208 + $0x9f0] sm:$0xff]
      %v547 = vld [vmem:[%s208 + $0x9f8] sm:$0xff]
      %v548 = vld [vmem:[%s208 + $0xa00] sm:$0xff]
      %v549 = vld [vmem:[%s208 + $0xa08] sm:$0xff]
      %v550 = vld [vmem:[%s208 + $0xa10] sm:$0xff]
      %v551 = vld [vmem:[%s208 + $0xa18] sm:$0xff]
      %v552 = vld [vmem:[%s208 + $0xa20] sm:$0xff]
      %v553 = vld [vmem:[%s208 + $0xa28] sm:$0xff]
      %v554 = vld [vmem:[%s208 + $0xa30] sm:$0xff]
      %v555 = vld [vmem:[%s208 + $0xa38] sm:$0xff]
      %v556 = vld [vmem:[%s208 + $0xa40] sm:$0xff]
      %v557 = vld [vmem:[%s208 + $0xa48] sm:$0xff]
      %v558 = vld [vmem:[%s208 + $0xa50] sm:$0xff]
      %v559 = vld [vmem:[%s208 + $0xa58] sm:$0xff]
      %v560 = vld [vmem:[%s208 + $0xa60] sm:$0xff]
      %v561 = vld [vmem:[%s208 + $0xa68] sm:$0xff]
      %v562 = vld [vmem:[%s208 + $0xa70] sm:$0xff]
      %v563 = vld [vmem:[%s208 + $0xa78] sm:$0xff]
      %v564 = vld [vmem:[%s208 + $0xa80] sm:$0xff]
      %v565 = vld [vmem:[%s208 + $0xa88] sm:$0xff]
      %v566 = vld [vmem:[%s208 + $0xa90] sm:$0xff]
      %v567 = vld [vmem:[%s208 + $0xa98] sm:$0xff]
      %v568 = vld [vmem:[%s208 + $0xaa0] sm:$0xff]
      %v569 = vld [vmem:[%s208 + $0xaa8] sm:$0xff]
      %v570 = vld [vmem:[%s208 + $0xab0] sm:$0xff]
      %v571 = vld [vmem:[%s208 + $0xab8] sm:$0xff]
      %v572 = vld [vmem:[%s208 + $0xac0] sm:$0xff]
      %v573 = vld [vmem:[%s208 + $0xac8] sm:$0xff]
      %v574 = vld [vmem:[%s208 + $0xad0] sm:$0xff]
      %v575 = vld [vmem:[%s208 + $0xad8] sm:$0xff]
      %v576 = vld [vmem:[%s208 + $0xae0] sm:$0xff]
      %v577 = vld [vmem:[%s208 + $0xae8] sm:$0xff]
      %v578 = vld [vmem:[%s208 + $0xaf0] sm:$0xff]
      %v579 = vld [vmem:[%s208 + $0xaf8] sm:$0xff]
      %v580 = vld [vmem:[%s208 + $0xb00] sm:$0xff]
      %v581 = vld [vmem:[%s208 + $0xb08] sm:$0xff]
      %v582 = vld [vmem:[%s208 + $0xb10] sm:$0xff]
      %v583 = vld [vmem:[%s208 + $0xb18] sm:$0xff]
      %v584 = vld [vmem:[%s208 + $0xb20] sm:$0xff]
      %v585 = vld [vmem:[%s208 + $0xb28] sm:$0xff]
      %v586 = vld [vmem:[%s208 + $0xb30] sm:$0xff]
      %v587 = vld [vmem:[%s208 + $0xb38] sm:$0xff]
      %v588 = vld [vmem:[%s208 + $0xb40] sm:$0xff]
      %v589 = vld [vmem:[%s208 + $0xb48] sm:$0xff]
      %v590 = vld [vmem:[%s208 + $0xb50] sm:$0xff]
      %v591 = vld [vmem:[%s208 + $0xb58] sm:$0xff]
      %v592 = vld [vmem:[%s208 + $0xb60] sm:$0xff]
      %v593 = vld [vmem:[%s208 + $0xb68] sm:$0xff]
      %v594 = vld [vmem:[%s208 + $0xb70] sm:$0xff]
      %v595 = vld [vmem:[%s208 + $0xb78] sm:$0xff]
      %v596 = vld [vmem:[%s208 + $0xb80] sm:$0xff]
      %v597 = vld [vmem:[%s208 + $0xb88] sm:$0xff]
      %v598 = vld [vmem:[%s208 + $0xb90] sm:$0xff]
      %v599 = vld [vmem:[%s208 + $0xb98] sm:$0xff]
      %v600 = vld [vmem:[%s208 + $0xba0] sm:$0xff]
      %v601 = vld [vmem:[%s208 + $0xba8] sm:$0xff]
      %v602 = vld [vmem:[%s208 + $0xbb0] sm:$0xff]
      %v603 = vld [vmem:[%s208 + $0xbb8] sm:$0xff]
      %v604 = vld [vmem:[%s208 + $0xbc0] sm:$0xff]
      %v605 = vld [vmem:[%s208 + $0xbc8] sm:$0xff]
      %v606 = vld [vmem:[%s208 + $0xbd0] sm:$0xff]
      %v607 = vld [vmem:[%s208 + $0xbd8] sm:$0xff]
      %v608 = vld [vmem:[%s208 + $0xbe0] sm:$0xff]
      %v609 = vld [vmem:[%s208 + $0xbe8] sm:$0xff]
      %v610 = vld [vmem:[%s208 + $0xbf0] sm:$0xff]
      %v611 = vld [vmem:[%s208 + $0xbf8] sm:$0xff]
      %612 = vmatprep.subr.mxu0 %v229
      %613 = vmatpush1.msra.mxu0 %v228
      %614 = vmatprep.subr.mxu0 %v233
      %615 = vmatpush1.msra.mxu0 %v232
      %616 = vmatprep.subr.mxu0 %v237
      %617 = vmatpush1.msra.mxu0 %v236
      %618 = vmatprep.subr.mxu0 %v241
      %619 = vmatpush1.msra.mxu0 %v240
      %620 = vmatprep.subr.mxu0 %v245
      %621 = vmatpush1.msra.mxu0 %v244
      %622 = vmatprep.subr.mxu0 %v249
      %623 = vmatpush1.msra.mxu0 %v248
      %624 = vmatprep.subr.mxu0 %v253
      %625 = vmatpush1.msra.mxu0 %v252
      %626 = vmatprep.subr.mxu0 %v257
      %627 = vmatpush1.msra.mxu0 %v256
      %628 = vmatprep.subr.mxu0 %v261
      %629 = vmatpush1.msra.mxu0 %v260
      %630 = vmatprep.subr.mxu0 %v265
      %631 = vmatpush1.msra.mxu0 %v264
      %632 = vmatprep.subr.mxu0 %v269
      %633 = vmatpush1.msra.mxu0 %v268
      %634 = vmatprep.subr.mxu0 %v273
      %635 = vmatpush1.msra.mxu0 %v272
      %636 = vmatprep.subr.mxu0 %v277
      %637 = vmatpush1.msra.mxu0 %v276
      %638 = vmatprep.subr.mxu0 %v281
      %639 = vmatpush1.msra.mxu0 %v280
      %640 = vmatprep.subr.mxu0 %v285
      %641 = vmatpush1.msra.mxu0 %v284
      %642 = vmatprep.subr.mxu0 %v289
      %643 = vmatpush1.msra.mxu0 %v288
      %644 = vmatprep.subr.mxu0 %v293
      %645 = vmatpush1.msra.mxu0 %v292
      %646 = vmatprep.subr.mxu0 %v297
      %647 = vmatpush1.msra.mxu0 %v296
      %648 = vmatprep.subr.mxu0 %v301
      %649 = vmatpush1.msra.mxu0 %v300
      %650 = vmatprep.subr.mxu0 %v305
      %651 = vmatpush1.msra.mxu0 %v304
      %652 = vmatprep.subr.mxu0 %v309
      %653 = vmatpush1.msra.mxu0 %v308
      %654 = vmatprep.subr.mxu0 %v313
      %655 = vmatpush1.msra.mxu0 %v312
      %656 = vmatprep.subr.mxu0 %v317
      %657 = vmatpush1.msra.mxu0 %v316
      %658 = vmatprep.subr.mxu0 %v321
      %659 = vmatpush1.msra.mxu0 %v320
      %660 = vmatprep.subr.mxu0 %v325
      %661 = vmatpush1.msra.mxu0 %v324
      %662 = vmatprep.subr.mxu0 %v329
      %663 = vmatpush1.msra.mxu0 %v328
      %664 = vmatprep.subr.mxu0 %v333
      %665 = vmatpush1.msra.mxu0 %v332
      %666 = vmatprep.subr.mxu0 %v337
      %667 = vmatpush1.msra.mxu0 %v336
      %668 = vmatprep.subr.mxu0 %v341
      %669 = vmatpush1.msra.mxu0 %v340
      %670 = vmatprep.subr.mxu0 %v345
      %671 = vmatpush1.msra.mxu0 %v344
      %672 = vmatprep.subr.mxu0 %v349
      %673 = vmatpush1.msra.mxu0 %v348
      %674 = vmatprep.subr.mxu0 %v353
      %675 = vmatpush1.msra.mxu0 %v352
      %676 = vmatprep.mubr.f32.mxu0 %v223
      %677 = vmatmul.mubr.f32.gmra.mrb[0].mxu0 %v222
      %v678 = vpop.f32.mrb[0].mxu0
      %v679 = vadd.f32 0.0, %v678
      %v680 = vpop.f32.mrb[0].mxu0
      %v681 = vadd.f32 0.0, %v680
      %682 = vdwg.mxu0
      %683 = vmatprep.subr.mxu0 %v357
      %684 = vmatpush1.msra.mxu0 %v356
      %685 = vmatprep.subr.mxu0 %v361
      %686 = vmatpush1.msra.mxu0 %v360
      %687 = vmatprep.subr.mxu0 %v365
      %688 = vmatpush1.msra.mxu0 %v364
      %689 = vmatprep.subr.mxu0 %v369
      %690 = vmatpush1.msra.mxu0 %v368
      %691 = vmatprep.subr.mxu0 %v373
      %692 = vmatpush1.msra.mxu0 %v372
      %693 = vmatprep.subr.mxu0 %v377
      %694 = vmatpush1.msra.mxu0 %v376
      %695 = vmatprep.subr.mxu0 %v381
      %696 = vmatpush1.msra.mxu0 %v380
      %697 = vmatprep.subr.mxu0 %v385
      %698 = vmatpush1.msra.mxu0 %v384
      %699 = vmatprep.subr.mxu0 %v389
      %700 = vmatpush1.msra.mxu0 %v388
      %701 = vmatprep.subr.mxu0 %v393
      %702 = vmatpush1.msra.mxu0 %v392
      %703 = vmatprep.subr.mxu0 %v397
      %704 = vmatpush1.msra.mxu0 %v396
      %705 = vmatprep.subr.mxu0 %v401
      %706 = vmatpush1.msra.mxu0 %v400
      %707 = vmatprep.subr.mxu0 %v405
      %708 = vmatpush1.msra.mxu0 %v404
      %709 = vmatprep.subr.mxu0 %v409
      %710 = vmatpush1.msra.mxu0 %v408
      %711 = vmatprep.subr.mxu0 %v413
      %712 = vmatpush1.msra.mxu0 %v412
      %713 = vmatprep.subr.mxu0 %v417
      %714 = vmatpush1.msra.mxu0 %v416
      %715 = vmatprep.subr.mxu0 %v421
      %716 = vmatpush1.msra.mxu0 %v420
      %717 = vmatprep.subr.mxu0 %v425
      %718 = vmatpush1.msra.mxu0 %v424
      %719 = vmatprep.subr.mxu0 %v429
      %720 = vmatpush1.msra.mxu0 %v428
      %721 = vmatprep.subr.mxu0 %v433
      %722 = vmatpush1.msra.mxu0 %v432
      %723 = vmatprep.subr.mxu0 %v437
      %724 = vmatpush1.msra.mxu0 %v436
      %725 = vmatprep.subr.mxu0 %v441
      %726 = vmatpush1.msra.mxu0 %v440
      %727 = vmatprep.subr.mxu0 %v445
      %728 = vmatpush1.msra.mxu0 %v444
      %729 = vmatprep.subr.mxu0 %v449
      %730 = vmatpush1.msra.mxu0 %v448
      %731 = vmatprep.subr.mxu0 %v453
      %732 = vmatpush1.msra.mxu0 %v452
      %733 = vmatprep.subr.mxu0 %v457
      %734 = vmatpush1.msra.mxu0 %v456
      %735 = vmatprep.subr.mxu0 %v461
      %736 = vmatpush1.msra.mxu0 %v460
      %737 = vmatprep.subr.mxu0 %v465
      %738 = vmatpush1.msra.mxu0 %v464
      %739 = vmatprep.subr.mxu0 %v469
      %740 = vmatpush1.msra.mxu0 %v468
      %741 = vmatprep.subr.mxu0 %v473
      %742 = vmatpush1.msra.mxu0 %v472
      %743 = vmatprep.subr.mxu0 %v477
      %744 = vmatpush1.msra.mxu0 %v476
      %745 = vmatprep.subr.mxu0 %v481
      %746 = vmatpush1.msra.mxu0 %v480
      %747 = vmatprep.mubr.f32.mxu0 %v225
      %748 = vmatmul.mubr.f32.gmra.mrb[0].mxu0 %v224
      %v749 = vpop.f32.mrb[0].mxu0
      %v750 = vadd.f32 %v679, %v749
      %v751 = vpop.f32.mrb[0].mxu0
      %v752 = vadd.f32 %v681, %v751
      %753 = vdwg.mxu0
      %754 = vmatprep.subr.mxu0 %v485
      %755 = vmatpush1.msra.mxu0 %v484
      %756 = vmatprep.subr.mxu0 %v489
      %757 = vmatpush1.msra.mxu0 %v488
      %758 = vmatprep.subr.mxu0 %v493
      %759 = vmatpush1.msra.mxu0 %v492
      %760 = vmatprep.subr.mxu0 %v497
      %761 = vmatpush1.msra.mxu0 %v496
      %762 = vmatprep.subr.mxu0 %v501
      %763 = vmatpush1.msra.mxu0 %v500
      %764 = vmatprep.subr.mxu0 %v505
      %765 = vmatpush1.msra.mxu0 %v504
      %766 = vmatprep.subr.mxu0 %v509
      %767 = vmatpush1.msra.mxu0 %v508
      %768 = vmatprep.subr.mxu0 %v513
      %769 = vmatpush1.msra.mxu0 %v512
      %770 = vmatprep.subr.mxu0 %v517
      %771 = vmatpush1.msra.mxu0 %v516
      %772 = vmatprep.subr.mxu0 %v521
      %773 = vmatpush1.msra.mxu0 %v520
      %774 = vmatprep.subr.mxu0 %v525
      %775 = vmatpush1.msra.mxu0 %v524
      %776 = vmatprep.subr.mxu0 %v529
      %777 = vmatpush1.msra.mxu0 %v528
      %778 = vmatprep.subr.mxu0 %v533
      %779 = vmatpush1.msra.mxu0 %v532
      %780 = vmatprep.subr.mxu0 %v537
      %781 = vmatpush1.msra.mxu0 %v536
      %782 = vmatprep.subr.mxu0 %v541
      %783 = vmatpush1.msra.mxu0 %v540
      %784 = vmatprep.subr.mxu0 %v545
      %785 = vmatpush1.msra.mxu0 %v544
      %786 = vmatprep.subr.mxu0 %v549
      %787 = vmatpush1.msra.mxu0 %v548
      %788 = vmatprep.subr.mxu0 %v553
      %789 = vmatpush1.msra.mxu0 %v552
      %790 = vmatprep.subr.mxu0 %v557
      %791 = vmatpush1.msra.mxu0 %v556
      %792 = vmatprep.subr.mxu0 %v561
      %793 = vmatpush1.msra.mxu0 %v560
      %794 = vmatprep.subr.mxu0 %v565
      %795 = vmatpush1.msra.mxu0 %v564
      %796 = vmatprep.subr.mxu0 %v569
      %797 = vmatpush1.msra.mxu0 %v568
      %798 = vmatprep.subr.mxu0 %v573
      %799 = vmatpush1.msra.mxu0 %v572
      %800 = vmatprep.subr.mxu0 %v577
      %801 = vmatpush1.msra.mxu0 %v576
      %802 = vmatprep.subr.mxu0 %v581
      %803 = vmatpush1.msra.mxu0 %v580
      %804 = vmatprep.subr.mxu0 %v585
      %805 = vmatpush1.msra.mxu0 %v584
      %806 = vmatprep.subr.mxu0 %v589
      %807 = vmatpush1.msra.mxu0 %v588
      %808 = vmatprep.subr.mxu0 %v593
      %809 = vmatpush1.msra.mxu0 %v592
      %810 = vmatprep.subr.mxu0 %v597
      %811 = vmatpush1.msra.mxu0 %v596
      %812 = vmatprep.subr.mxu0 %v601
      %813 = vmatpush1.msra.mxu0 %v600
      %814 = vmatprep.subr.mxu0 %v605
      %815 = vmatpush1.msra.mxu0 %v604
      %816 = vmatprep.subr.mxu0 %v609
      %817 = vmatpush1.msra.mxu0 %v608
      %818 = vmatprep.mubr.f32.mxu0 %v227
      %819 = vmatmul.mubr.f32.gmra.mrb[0].mxu0 %v226
      %v820 = vpop.f32.mrb[0].mxu0
      %v821 = vadd.f32 %v750, %v820
      %v822 = vpop.f32.mrb[0].mxu0
      %v823 = vadd.f32 %v752, %v822
      %824 = vdwg.mxu0
      %825 = vmatprep.subr.mxu0 %v231
      %826 = vmatpush1.msra.mxu0 %v230
      %827 = vmatprep.subr.mxu0 %v235
      %828 = vmatpush1.msra.mxu0 %v234
      %829 = vmatprep.subr.mxu0 %v239
      %830 = vmatpush1.msra.mxu0 %v238
      %831 = vmatprep.subr.mxu0 %v243
      %832 = vmatpush1.msra.mxu0 %v242
      %833 = vmatprep.subr.mxu0 %v247
      %834 = vmatpush1.msra.mxu0 %v246
      %835 = vmatprep.subr.mxu0 %v251
      %836 = vmatpush1.msra.mxu0 %v250
      %837 = vmatprep.subr.mxu0 %v255
      %838 = vmatpush1.msra.mxu0 %v254
      %839 = vmatprep.subr.mxu0 %v259
      %840 = vmatpush1.msra.mxu0 %v258
      %841 = vmatprep.subr.mxu0 %v263
      %842 = vmatpush1.msra.mxu0 %v262
      %843 = vmatprep.subr.mxu0 %v267
      %844 = vmatpush1.msra.mxu0 %v266
      %845 = vmatprep.subr.mxu0 %v271
      %846 = vmatpush1.msra.mxu0 %v270
      %847 = vmatprep.subr.mxu0 %v275
      %848 = vmatpush1.msra.mxu0 %v274
      %849 = vmatprep.subr.mxu0 %v279
      %850 = vmatpush1.msra.mxu0 %v278
      %851 = vmatprep.subr.mxu0 %v283
      %852 = vmatpush1.msra.mxu0 %v282
      %853 = vmatprep.subr.mxu0 %v287
      %854 = vmatpush1.msra.mxu0 %v286
      %855 = vmatprep.subr.mxu0 %v291
      %856 = vmatpush1.msra.mxu0 %v290
      %857 = vmatprep.subr.mxu0 %v295
      %858 = vmatpush1.msra.mxu0 %v294
      %859 = vmatprep.subr.mxu0 %v299
      %860 = vmatpush1.msra.mxu0 %v298
      %861 = vmatprep.subr.mxu0 %v303
      %862 = vmatpush1.msra.mxu0 %v302
      %863 = vmatprep.subr.mxu0 %v307
      %864 = vmatpush1.msra.mxu0 %v306
      %865 = vmatprep.subr.mxu0 %v311
      %866 = vmatpush1.msra.mxu0 %v310
      %867 = vmatprep.subr.mxu0 %v315
      %868 = vmatpush1.msra.mxu0 %v314
      %869 = vmatprep.subr.mxu0 %v319
      %870 = vmatpush1.msra.mxu0 %v318
      %871 = vmatprep.subr.mxu0 %v323
      %872 = vmatpush1.msra.mxu0 %v322
      %873 = vmatprep.subr.mxu0 %v327
      %874 = vmatpush1.msra.mxu0 %v326
      %875 = vmatprep.subr.mxu0 %v331
      %876 = vmatpush1.msra.mxu0 %v330
      %877 = vmatprep.subr.mxu0 %v335
      %878 = vmatpush1.msra.mxu0 %v334
      %879 = vmatprep.subr.mxu0 %v339
      %880 = vmatpush1.msra.mxu0 %v338
      %881 = vmatprep.subr.mxu0 %v343
      %882 = vmatpush1.msra.mxu0 %v342
      %883 = vmatprep.subr.mxu0 %v347
      %884 = vmatpush1.msra.mxu0 %v346
      %885 = vmatprep.subr.mxu0 %v351
      %886 = vmatpush1.msra.mxu0 %v350
      %887 = vmatprep.subr.mxu0 %v355
      %888 = vmatpush1.msra.mxu0 %v354
      %889 = vmatprep.mubr.f32.mxu0 %v223
      %890 = vmatmul.mubr.f32.gmra.mrb[0].mxu0 %v222
      %v891 = vpop.f32.mrb[0].mxu0
      %v892 = vadd.f32 0.0, %v891
      %v893 = vpop.f32.mrb[0].mxu0
      %v894 = vadd.f32 0.0, %v893
      %895 = vdwg.mxu0
      %896 = vmatprep.subr.mxu0 %v359
      %897 = vmatpush1.msra.mxu0 %v358
      %898 = vmatprep.subr.mxu0 %v363
      %899 = vmatpush1.msra.mxu0 %v362
      %900 = vmatprep.subr.mxu0 %v367
      %901 = vmatpush1.msra.mxu0 %v366
      %902 = vmatprep.subr.mxu0 %v371
      %903 = vmatpush1.msra.mxu0 %v370
      %904 = vmatprep.subr.mxu0 %v375
      %905 = vmatpush1.msra.mxu0 %v374
      %906 = vmatprep.subr.mxu0 %v379
      %907 = vmatpush1.msra.mxu0 %v378
      %908 = vmatprep.subr.mxu0 %v383
      %909 = vmatpush1.msra.mxu0 %v382
      %910 = vmatprep.subr.mxu0 %v387
      %911 = vmatpush1.msra.mxu0 %v386
      %912 = vmatprep.subr.mxu0 %v391
      %913 = vmatpush1.msra.mxu0 %v390
      %914 = vmatprep.subr.mxu0 %v395
      %915 = vmatpush1.msra.mxu0 %v394
      %916 = vmatprep.subr.mxu0 %v399
      %917 = vmatpush1.msra.mxu0 %v398
      %918 = vmatprep.subr.mxu0 %v403
      %919 = vmatpush1.msra.mxu0 %v402
      %920 = vmatprep.subr.mxu0 %v407
      %921 = vmatpush1.msra.mxu0 %v406
      %922 = vmatprep.subr.mxu0 %v411
      %923 = vmatpush1.msra.mxu0 %v410
      %924 = vmatprep.subr.mxu0 %v415
      %925 = vmatpush1.msra.mxu0 %v414
      %926 = vmatprep.subr.mxu0 %v419
      %927 = vmatpush1.msra.mxu0 %v418
      %928 = vmatprep.subr.mxu0 %v423
      %929 = vmatpush1.msra.mxu0 %v422
      %930 = vmatprep.subr.mxu0 %v427
      %931 = vmatpush1.msra.mxu0 %v426
      %932 = vmatprep.subr.mxu0 %v431
      %933 = vmatpush1.msra.mxu0 %v430
      %934 = vmatprep.subr.mxu0 %v435
      %935 = vmatpush1.msra.mxu0 %v434
      %936 = vmatprep.subr.mxu0 %v439
      %937 = vmatpush1.msra.mxu0 %v438
      %938 = vmatprep.subr.mxu0 %v443
      %939 = vmatpush1.msra.mxu0 %v442
      %940 = vmatprep.subr.mxu0 %v447
      %941 = vmatpush1.msra.mxu0 %v446
      %942 = vmatprep.subr.mxu0 %v451
      %943 = vmatpush1.msra.mxu0 %v450
      %944 = vmatprep.subr.mxu0 %v455
      %945 = vmatpush1.msra.mxu0 %v454
      %946 = vmatprep.subr.mxu0 %v459
      %947 = vmatpush1.msra.mxu0 %v458
      %948 = vmatprep.subr.mxu0 %v463
      %949 = vmatpush1.msra.mxu0 %v462
      %950 = vmatprep.subr.mxu0 %v467
      %951 = vmatpush1.msra.mxu0 %v466
      %952 = vmatprep.subr.mxu0 %v471
      %953 = vmatpush1.msra.mxu0 %v470
      %954 = vmatprep.subr.mxu0 %v475
      %955 = vmatpush1.msra.mxu0 %v474
      %956 = vmatprep.subr.mxu0 %v479
      %957 = vmatpush1.msra.mxu0 %v478
      %958 = vmatprep.subr.mxu0 %v483
      %959 = vmatpush1.msra.mxu0 %v482
      %960 = vmatprep.mubr.f32.mxu0 %v225
      %961 = vmatmul.mubr.f32.gmra.mrb[0].mxu0 %v224
      %v962 = vpop.f32.mrb[0].mxu0
      %v963 = vadd.f32 %v892, %v962
      %v964 = vpop.f32.mrb[0].mxu0
      %v965 = vadd.f32 %v894, %v964
      %966 = vdwg.mxu0
      %967 = vmatprep.subr.mxu0 %v487
      %968 = vmatpush1.msra.mxu0 %v486
      %969 = vmatprep.subr.mxu0 %v491
      %970 = vmatpush1.msra.mxu0 %v490
      %971 = vmatprep.subr.mxu0 %v495
      %972 = vmatpush1.msra.mxu0 %v494
      %973 = vmatprep.subr.mxu0 %v499
      %974 = vmatpush1.msra.mxu0 %v498
      %975 = vmatprep.subr.mxu0 %v503
      %976 = vmatpush1.msra.mxu0 %v502
      %977 = vmatprep.subr.mxu0 %v507
      %978 = vmatpush1.msra.mxu0 %v506
      %979 = vmatprep.subr.mxu0 %v511
      %980 = vmatpush1.msra.mxu0 %v510
      %981 = vmatprep.subr.mxu0 %v515
      %982 = vmatpush1.msra.mxu0 %v514
      %983 = vmatprep.subr.mxu0 %v519
      %984 = vmatpush1.msra.mxu0 %v518
      %985 = vmatprep.subr.mxu0 %v523
      %986 = vmatpush1.msra.mxu0 %v522
      %987 = vmatprep.subr.mxu0 %v527
      %988 = vmatpush1.msra.mxu0 %v526
      %989 = vmatprep.subr.mxu0 %v531
      %990 = vmatpush1.msra.mxu0 %v530
      %991 = vmatprep.subr.mxu0 %v535
      %992 = vmatpush1.msra.mxu0 %v534
      %993 = vmatprep.subr.mxu0 %v539
      %994 = vmatpush1.msra.mxu0 %v538
      %995 = vmatprep.subr.mxu0 %v543
      %996 = vmatpush1.msra.mxu0 %v542
      %997 = vmatprep.subr.mxu0 %v547
      %998 = vmatpush1.msra.mxu0 %v546
      %999 = vmatprep.subr.mxu0 %v551
      %1000 = vmatpush1.msra.mxu0 %v550
      %1001 = vmatprep.subr.mxu0 %v555
      %1002 = vmatpush1.msra.mxu0 %v554
      %1003 = vmatprep.subr.mxu0 %v559
      %1004 = vmatpush1.msra.mxu0 %v558
      %1005 = vmatprep.subr.mxu0 %v563
      %1006 = vmatpush1.msra.mxu0 %v562
      %1007 = vmatprep.subr.mxu0 %v567
      %1008 = vmatpush1.msra.mxu0 %v566
      %1009 = vmatprep.subr.mxu0 %v571
      %1010 = vmatpush1.msra.mxu0 %v570
      %1011 = vmatprep.subr.mxu0 %v575
      %1012 = vmatpush1.msra.mxu0 %v574
      %1013 = vmatprep.subr.mxu0 %v579
      %1014 = vmatpush1.msra.mxu0 %v578
      %1015 = vmatprep.subr.mxu0 %v583
      %1016 = vmatpush1.msra.mxu0 %v582
      %1017 = vmatprep.subr.mxu0 %v587
      %1018 = vmatpush1.msra.mxu0 %v586
      %1019 = vmatprep.subr.mxu0 %v591
      %1020 = vmatpush1.msra.mxu0 %v590
      %1021 = vmatprep.subr.mxu0 %v595
      %1022 = vmatpush1.msra.mxu0 %v594
      %1023 = vmatprep.subr.mxu0 %v599
      %1024 = vmatpush1.msra.mxu0 %v598
      %1025 = vmatprep.subr.mxu0 %v603
      %1026 = vmatpush1.msra.mxu0 %v602
      %1027 = vmatprep.subr.mxu0 %v607
      %1028 = vmatpush1.msra.mxu0 %v606
      %1029 = vmatprep.subr.mxu0 %v611
      %1030 = vmatpush1.msra.mxu0 %v610
      %1031 = vmatprep.mubr.f32.mxu0 %v227
      %1032 = vmatmul.mubr.f32.gmra.mrb[0].mxu0 %v226
      %v1033 = vpop.f32.mrb[0].mxu0
      %v1034 = vadd.f32 %v963, %v1033
      %v1035 = vpop.f32.mrb[0].mxu0
      %v1036 = vadd.f32 %v965, %v1035
      %1037 = vdwg.mxu0
      %v1038 = vadd.f32 %v218, %v821
      %v1039 = vadd.f32 %v219, %v823
      %v1040 = vadd.f32 %v220, %v1034
      %v1041 = vadd.f32 %v221, %v1036
      %1042 = vst [vmem:[#allocation2] sm:$0xff] %v1038
      %1043 = vst [vmem:[#allocation2 + $0x8] sm:$0xff] %v1039
      %1044 = vst [vmem:[#allocation2 + $0x10] sm:$0xff] %v1040
      %1045 = vst [vmem:[#allocation2 + $0x18] sm:$0xff] %v1041
      %p1046 = scmp.eq.s32.totalorder %s15, 1
      // Predicated region
      $region41: #{frru_forward.6} parent=35 // pred_check
        %p1047 = pneg %p1046
      $region42: #{frru_forward.6} parent=35 // pred_check_branch
        %1049 = sbr.rel (%p1047) target = $region44
      $region43: #{frru_forward.6} parent=35 // pred_region
        %v1050 = vld [vmem:[#allocation2] sm:$0xff]
        %v1051 = vld [vmem:[#allocation2 + $0x8] sm:$0xff]
        %v1052 = vld [vmem:[#allocation2 + $0x10] sm:$0xff]
        %v1053 = vld [vmem:[#allocation2 + $0x18] sm:$0xff]
        %v1054 = vadd.f32 %v1050, %v1051
        %v1055 = vadd.f32 %v1054, %v1052
        %v1056 = vadd.f32 %v1055, %v1053
        %1057 = vadd.xlane.f32.xlu0 %v1056
        %v1058 = vpop.xlane.xlu0 %1057
        %v1059 = vmul.f32 %v1058, 0.001953125
        %v1060 = vsub.f32 %v1050, %v1059
        %v1061 = vsub.f32 %v1051, %v1059
        %v1062 = vsub.f32 %v1052, %v1059
        %v1063 = vsub.f32 %v1053, %v1059
        %v1064 = vmul.f32 %v1060, %v1060
        %v1065 = vmul.f32 %v1061, %v1061
        %v1066 = vmul.f32 %v1062, %v1062
        %v1067 = vmul.f32 %v1063, %v1063
        %v1068 = vadd.f32 %v1064, %v1065
        %v1069 = vadd.f32 %v1068, %v1066
        %v1070 = vadd.f32 %v1069, %v1067
        %1071 = vadd.xlane.f32.xlu0 %v1070
        %v1072 = vpop.xlane.xlu0 %1071
        %v1073 = vmul.f32 %v1072, 0.001953125
        %v1074 = vadd.f32 %v1073, 1e-05
        %v1075 = vrsqrt.pop %v1074
        %v1076 = vld [vmem:[%s2] sm:$0xff]
        %v1077 = vmul.f32 %v1075, %v1076
        %1079 = vset.pattern.permute.xlu0 0
        %1080 = vperm.xlu0 %1079, %v1077
        %v1081 = vpop.permute.xlu0 %1080
        %v1083 = vmul.f32 %v1060, %v1081
        %v1084 = vmul.f32 %v1061, %v1081
        %v1085 = vmul.f32 %v1062, %v1081
        %v1086 = vmul.f32 %v1063, %v1081
        %v1087 = vld [vmem:[%s3] sm:$0xff]
        %1089 = vset.pattern.permute.xlu0 0
        %1090 = vperm.xlu0 %1089, %v1087
        %v1091 = vpop.permute.xlu0 %1090
        %v1093 = vadd.f32 %v1083, %v1091
        %v1094 = vadd.f32 %v1084, %v1091
        %v1095 = vadd.f32 %v1085, %v1091
        %v1096 = vadd.f32 %v1086, %v1091
        %v1097 = vmax.f32 %v1093, 0.0
        %v1098 = vmax.f32 %v1094, 0.0
        %v1099 = vmax.f32 %v1095, 0.0
        %v1100 = vmax.f32 %v1096, 0.0
        %1101 = vst [vmem:[%s4] sm:$0xff] %v1097
        %1102 = vst [vmem:[%s4 + $0x8] sm:$0xff] %v1098
        %1103 = vst [vmem:[%s4 + $0x10] sm:$0xff] %v1099
        %1104 = vst [vmem:[%s4 + $0x18] sm:$0xff] %v1100
      $region44: #{frru_forward.6} parent=35 // pred_fallthru
        _
      // Predicated region
      $region45: #{frru_forward.6} parent=35 // pred_check
        %p1105 = pneg %p122
      $region46: #{frru_forward.6} parent=35 // pred_check_branch
        %1107 = sbr.rel (%p1105) target = $region48
      $region47: #{frru_forward.6} parent=35 // pred_region
        _
      $region48: #{frru_forward.6} parent=35 // pred_fallthru
        _
      // Predicated region
      $region49: #{frru_forward.6} parent=35 // pred_check
        %p1108 = pneg %p122
      $region50: #{frru_forward.6} parent=35 // pred_check_branch
        %1110 = sbr.rel (%p1108) target = $region52
      $region51: #{frru_forward.6} parent=35 // pred_region
        _
      $region52: #{frru_forward.6} parent=35 // pred_fallthru
        _
    $region36: #{frru_forward.6} parent=5 // pred_fallthru
      _
    %p1111 = scmp.le.s32.totalorder 2, %s10
    // Predicated region
    $region53: #{frru_forward.6} parent=5 // pred_check
      %p1112 = pneg %p1111
    $region54: #{frru_forward.6} parent=5 // pred_check_branch
      %1114 = sbr.rel (%p1112) target = $region56
    $region55: #{frru_forward.6} parent=5 // pred_region
      %s1115 = ssub.s32 %s10, 2
    $region56: #{frru_forward.6} parent=5 // pred_fallthru
      _
  $region6: #{frru_forward.6} parent=0 // loop_footer
    %s14 = sadd.s32 1, %s10
  $region7: #{frru_forward.6} parent=0 // loop_footer_branch
    %9 = sbr.rel target = $region3
  $region8: #{frru_forward.6} parent=0 // loop_exit
    _

// kernel: frru_forward.8
$region0: #{frru_forward.8}
  #allocation0 [shape = 'u32[]', space=smem, size = 0x4, offset = 0x4, fixed_abs, tag = 'smem constant byte address 0x4 - core index']
  #allocation1 [shape = 'u32[144,128]{1,0:T(1,128)}', space=vmem, size = 0x12000, scoped, tag = 'internal scratch']
  #allocation2 [shape = 'f32[4,512]{1,0:T(4,128)}', space=vmem, size = 0x2000, scoped, tag = 'scratch operand']
  %s0 = inlined_call_operand.vmem [shape: f32[4,256], index: 0, kind: input, shape index: {}]
  %s1 = inlined_call_operand.vmem [shape: f32[256,512], index: 1, kind: input, shape index: {}]
  %s2 = inlined_call_operand.vmem [shape: f32[4,1], index: 2, kind: input, shape index: {}]
  %s3 = inlined_call_operand.vmem [shape: f32[4,512], index: 3, kind: output, shape index: {}]
  %s4 = sld [smem:[#allocation0]]
  $region30: #{frru_forward.8} parent=0
    _
  %s6 = ssub.s32 1, %s4
  %s7 = scalar_select 0, %s6, %s4
  // Predicated region
  $region2: #{frru_forward.8} parent=0 // pred_check
    _
  $region3: #{frru_forward.8} parent=0 // pred_check_branch
    %9 = sbr.rel (0) target = $region5
  $region4: #{frru_forward.8} parent=0 // pred_region
    _
  $region5: #{frru_forward.8} parent=0 // pred_fallthru
    _
  // Predicated region
  $region6: #{frru_forward.8} parent=0 // pred_check
    _
  $region7: #{frru_forward.8} parent=0 // pred_check_branch
    %11 = sbr.rel (0) target = $region9
  $region8: #{frru_forward.8} parent=0 // pred_region
    _
  $region9: #{frru_forward.8} parent=0 // pred_fallthru
    _
  // Predicated region
  $region10: #{frru_forward.8} parent=0 // pred_check
    _
  $region11: #{frru_forward.8} parent=0 // pred_check_branch
    %13 = sbr.rel (0) target = $region13
  $region12: #{frru_forward.8} parent=0 // pred_region
    _
  $region13: #{frru_forward.8} parent=0 // pred_fallthru
    _
  %p14 = scmp.eq.s32.totalorder 0, 0
  // Predicated region
  $region14: #{frru_forward.8} parent=0 // pred_check
    %p15 = pneg %p14
  $region15: #{frru_forward.8} parent=0 // pred_check_branch
    %17 = sbr.rel (%p15) target = $region17
  $region16: #{frru_forward.8} parent=0 // pred_region
    %v18 = vld [vmem:[%s2] sm:$0xf]
    %20 = vset.pattern.permute.xlu0 0
    %21 = vperm.xlu0 %20, %v18
    %v22 = vpop.permute.xlu0 %21
    %v24 = vadd.f32 %v22, 0.0
    %v27 = vunpack.c.l.s4 839922192
    %v28 = vunpack.c.0.s8 %v27
    %v29 = vlaneseq
    %v30 = vshrl.u32 %v29, 7
    %v31 = vsub.s32 %v28, %v30
    %v32 = vrot.slane %v24, %v31
    %34 = vst [vmem:[#allocation2] sm:$0xff] %v32
    %35 = vst [vmem:[#allocation2 + $0x8] sm:$0xff] %v32
  $region17: #{frru_forward.8} parent=0 // pred_fallthru
    _
  %v36 = vld [vmem:[#allocation2] sm:$0xff]
  %v37 = vld [vmem:[#allocation2 + $0x8] sm:$0xff]
  %v38 = vld [vmem:[%s0] sm:$0xff]
  %v39 = vld [vmem:[%s1] sm:$0xff]
  %v40 = vld [vmem:[%s1 + $0x8] sm:$0xff]
  %v41 = vld [vmem:[%s1 + $0x10] sm:$0xff]
  %v42 = vld [vmem:[%s1 + $0x18] sm:$0xff]
  %v43 = vld [vmem:[%s1 + $0x20] sm:$0xff]
  %v44 = vld [vmem:[%s1 + $0x28] sm:$0xff]
  %v45 = vld [vmem:[%s1 + $0x30] sm:$0xff]
  %v46 = vld [vmem:[%s1 + $0x38] sm:$0xff]
  %v47 = vld [vmem:[%s1 + $0x40] sm:$0xff]
  %v48 = vld [vmem:[%s1 + $0x48] sm:$0xff]
  %v49 = vld [vmem:[%s1 + $0x50] sm:$0xff]
  %v50 = vld [vmem:[%s1 + $0x58] sm:$0xff]
  %v51 = vld [vmem:[%s1 + $0x60] sm:$0xff]
  %v52 = vld [vmem:[%s1 + $0x68] sm:$0xff]
  %v53 = vld [vmem:[%s1 + $0x70] sm:$0xff]
  %v54 = vld [vmem:[%s1 + $0x78] sm:$0xff]
  %v55 = vld [vmem:[%s1 + $0x80] sm:$0xff]
  %v56 = vld [vmem:[%s1 + $0x88] sm:$0xff]
  %v57 = vld [vmem:[%s1 + $0x90] sm:$0xff]
  %v58 = vld [vmem:[%s1 + $0x98] sm:$0xff]
  %v59 = vld [vmem:[%s1 + $0xa0] sm:$0xff]
  %v60 = vld [vmem:[%s1 + $0xa8] sm:$0xff]
  %v61 = vld [vmem:[%s1 + $0xb0] sm:$0xff]
  %v62 = vld [vmem:[%s1 + $0xb8] sm:$0xff]
  %v63 = vld [vmem:[%s1 + $0xc0] sm:$0xff]
  %v64 = vld [vmem:[%s1 + $0xc8] sm:$0xff]
  %v65 = vld [vmem:[%s1 + $0xd0] sm:$0xff]
  %v66 = vld [vmem:[%s1 + $0xd8] sm:$0xff]
  %v67 = vld [vmem:[%s1 + $0xe0] sm:$0xff]
  %v68 = vld [vmem:[%s1 + $0xe8] sm:$0xff]
  %v69 = vld [vmem:[%s1 + $0xf0] sm:$0xff]
  %v70 = vld [vmem:[%s1 + $0xf8] sm:$0xff]
  %v71 = vld [vmem:[%s1 + $0x100] sm:$0xff]
  %v72 = vld [vmem:[%s1 + $0x108] sm:$0xff]
  %v73 = vld [vmem:[%s1 + $0x110] sm:$0xff]
  %v74 = vld [vmem:[%s1 + $0x118] sm:$0xff]
  %v75 = vld [vmem:[%s1 + $0x120] sm:$0xff]
  %v76 = vld [vmem:[%s1 + $0x128] sm:$0xff]
  %v77 = vld [vmem:[%s1 + $0x130] sm:$0xff]
  %v78 = vld [vmem:[%s1 + $0x138] sm:$0xff]
  %v79 = vld [vmem:[%s1 + $0x140] sm:$0xff]
  %v80 = vld [vmem:[%s1 + $0x148] sm:$0xff]
  %v81 = vld [vmem:[%s1 + $0x150] sm:$0xff]
  %v82 = vld [vmem:[%s1 + $0x158] sm:$0xff]
  %v83 = vld [vmem:[%s1 + $0x160] sm:$0xff]
  %v84 = vld [vmem:[%s1 + $0x168] sm:$0xff]
  %v85 = vld [vmem:[%s1 + $0x170] sm:$0xff]
  %v86 = vld [vmem:[%s1 + $0x178] sm:$0xff]
  %v87 = vld [vmem:[%s1 + $0x180] sm:$0xff]
  %v88 = vld [vmem:[%s1 + $0x188] sm:$0xff]
  %v89 = vld [vmem:[%s1 + $0x190] sm:$0xff]
  %v90 = vld [vmem:[%s1 + $0x198] sm:$0xff]
  %v91 = vld [vmem:[%s1 + $0x1a0] sm:$0xff]
  %v92 = vld [vmem:[%s1 + $0x1a8] sm:$0xff]
  %v93 = vld [vmem:[%s1 + $0x1b0] sm:$0xff]
  %v94 = vld [vmem:[%s1 + $0x1b8] sm:$0xff]
  %v95 = vld [vmem:[%s1 + $0x1c0] sm:$0xff]
  %v96 = vld [vmem:[%s1 + $0x1c8] sm:$0xff]
  %v97 = vld [vmem:[%s1 + $0x1d0] sm:$0xff]
  %v98 = vld [vmem:[%s1 + $0x1d8] sm:$0xff]
  %v99 = vld [vmem:[%s1 + $0x1e0] sm:$0xff]
  %v100 = vld [vmem:[%s1 + $0x1e8] sm:$0xff]
  %v101 = vld [vmem:[%s1 + $0x1f0] sm:$0xff]
  %v102 = vld [vmem:[%s1 + $0x1f8] sm:$0xff]
  %v103 = vld [vmem:[%s1 + $0x200] sm:$0xff]
  %v104 = vld [vmem:[%s1 + $0x208] sm:$0xff]
  %v105 = vld [vmem:[%s1 + $0x210] sm:$0xff]
  %v106 = vld [vmem:[%s1 + $0x218] sm:$0xff]
  %v107 = vld [vmem:[%s1 + $0x220] sm:$0xff]
  %v108 = vld [vmem:[%s1 + $0x228] sm:$0xff]
  %v109 = vld [vmem:[%s1 + $0x230] sm:$0xff]
  %v110 = vld [vmem:[%s1 + $0x238] sm:$0xff]
  %v111 = vld [vmem:[%s1 + $0x240] sm:$0xff]
  %v112 = vld [vmem:[%s1 + $0x248] sm:$0xff]
  %v113 = vld [vmem:[%s1 + $0x250] sm:$0xff]
  %v114 = vld [vmem:[%s1 + $0x258] sm:$0xff]
  %v115 = vld [vmem:[%s1 + $0x260] sm:$0xff]
  %v116 = vld [vmem:[%s1 + $0x268] sm:$0xff]
  %v117 = vld [vmem:[%s1 + $0x270] sm:$0xff]
  %v118 = vld [vmem:[%s1 + $0x278] sm:$0xff]
  %v119 = vld [vmem:[%s1 + $0x280] sm:$0xff]
  %v120 = vld [vmem:[%s1 + $0x288] sm:$0xff]
  %v121 = vld [vmem:[%s1 + $0x290] sm:$0xff]
  %v122 = vld [vmem:[%s1 + $0x298] sm:$0xff]
  %v123 = vld [vmem:[%s1 + $0x2a0] sm:$0xff]
  %v124 = vld [vmem:[%s1 + $0x2a8] sm:$0xff]
  %v125 = vld [vmem:[%s1 + $0x2b0] sm:$0xff]
  %v126 = vld [vmem:[%s1 + $0x2b8] sm:$0xff]
  %v127 = vld [vmem:[%s1 + $0x2c0] sm:$0xff]
  %v128 = vld [vmem:[%s1 + $0x2c8] sm:$0xff]
  %v129 = vld [vmem:[%s1 + $0x2d0] sm:$0xff]
  %v130 = vld [vmem:[%s1 + $0x2d8] sm:$0xff]
  %v131 = vld [vmem:[%s1 + $0x2e0] sm:$0xff]
  %v132 = vld [vmem:[%s1 + $0x2e8] sm:$0xff]
  %v133 = vld [vmem:[%s1 + $0x2f0] sm:$0xff]
  %v134 = vld [vmem:[%s1 + $0x2f8] sm:$0xff]
  %v135 = vld [vmem:[%s1 + $0x300] sm:$0xff]
  %v136 = vld [vmem:[%s1 + $0x308] sm:$0xff]
  %v137 = vld [vmem:[%s1 + $0x310] sm:$0xff]
  %v138 = vld [vmem:[%s1 + $0x318] sm:$0xff]
  %v139 = vld [vmem:[%s1 + $0x320] sm:$0xff]
  %v140 = vld [vmem:[%s1 + $0x328] sm:$0xff]
  %v141 = vld [vmem:[%s1 + $0x330] sm:$0xff]
  %v142 = vld [vmem:[%s1 + $0x338] sm:$0xff]
  %v143 = vld [vmem:[%s1 + $0x340] sm:$0xff]
  %v144 = vld [vmem:[%s1 + $0x348] sm:$0xff]
  %v145 = vld [vmem:[%s1 + $0x350] sm:$0xff]
  %v146 = vld [vmem:[%s1 + $0x358] sm:$0xff]
  %v147 = vld [vmem:[%s1 + $0x360] sm:$0xff]
  %v148 = vld [vmem:[%s1 + $0x368] sm:$0xff]
  %v149 = vld [vmem:[%s1 + $0x370] sm:$0xff]
  %v150 = vld [vmem:[%s1 + $0x378] sm:$0xff]
  %v151 = vld [vmem:[%s1 + $0x380] sm:$0xff]
  %v152 = vld [vmem:[%s1 + $0x388] sm:$0xff]
  %v153 = vld [vmem:[%s1 + $0x390] sm:$0xff]
  %v154 = vld [vmem:[%s1 + $0x398] sm:$0xff]
  %v155 = vld [vmem:[%s1 + $0x3a0] sm:$0xff]
  %v156 = vld [vmem:[%s1 + $0x3a8] sm:$0xff]
  %v157 = vld [vmem:[%s1 + $0x3b0] sm:$0xff]
  %v158 = vld [vmem:[%s1 + $0x3b8] sm:$0xff]
  %v159 = vld [vmem:[%s1 + $0x3c0] sm:$0xff]
  %v160 = vld [vmem:[%s1 + $0x3c8] sm:$0xff]
  %v161 = vld [vmem:[%s1 + $0x3d0] sm:$0xff]
  %v162 = vld [vmem:[%s1 + $0x3d8] sm:$0xff]
  %v163 = vld [vmem:[%s1 + $0x3e0] sm:$0xff]
  %v164 = vld [vmem:[%s1 + $0x3e8] sm:$0xff]
  %v165 = vld [vmem:[%s1 + $0x3f0] sm:$0xff]
  %v166 = vld [vmem:[%s1 + $0x3f8] sm:$0xff]
  %v168 = vcombine.high %v38, %v38
  %170 = vmatprep.subr.mxu0 %v40
  %171 = vmatpush1.msra.mxu0 %v39
  %172 = vmatprep.subr.mxu0 %v44
  %173 = vmatpush1.msra.mxu0 %v43
  %174 = vmatprep.subr.mxu0 %v48
  %175 = vmatpush1.msra.mxu0 %v47
  %176 = vmatprep.subr.mxu0 %v52
  %177 = vmatpush1.msra.mxu0 %v51
  %178 = vmatprep.subr.mxu0 %v56
  %179 = vmatpush1.msra.mxu0 %v55
  %180 = vmatprep.subr.mxu0 %v60
  %181 = vmatpush1.msra.mxu0 %v59
  %182 = vmatprep.subr.mxu0 %v64
  %183 = vmatpush1.msra.mxu0 %v63
  %184 = vmatprep.subr.mxu0 %v68
  %185 = vmatpush1.msra.mxu0 %v67
  %186 = vmatprep.subr.mxu0 %v72
  %187 = vmatpush1.msra.mxu0 %v71
  %188 = vmatprep.subr.mxu0 %v76
  %189 = vmatpush1.msra.mxu0 %v75
  %190 = vmatprep.subr.mxu0 %v80
  %191 = vmatpush1.msra.mxu0 %v79
  %192 = vmatprep.subr.mxu0 %v84
  %193 = vmatpush1.msra.mxu0 %v83
  %194 = vmatprep.subr.mxu0 %v88
  %195 = vmatpush1.msra.mxu0 %v87
  %196 = vmatprep.subr.mxu0 %v92
  %197 = vmatpush1.msra.mxu0 %v91
  %198 = vmatprep.subr.mxu0 %v96
  %199 = vmatpush1.msra.mxu0 %v95
  %200 = vmatprep.subr.mxu0 %v100
  %201 = vmatpush1.msra.mxu0 %v99
  %202 = vmatprep.subr.mxu0 %v104
  %203 = vmatpush1.msra.mxu0 %v103
  %204 = vmatprep.subr.mxu0 %v108
  %205 = vmatpush1.msra.mxu0 %v107
  %206 = vmatprep.subr.mxu0 %v112
  %207 = vmatpush1.msra.mxu0 %v111
  %208 = vmatprep.subr.mxu0 %v116
  %209 = vmatpush1.msra.mxu0 %v115
  %210 = vmatprep.subr.mxu0 %v120
  %211 = vmatpush1.msra.mxu0 %v119
  %212 = vmatprep.subr.mxu0 %v124
  %213 = vmatpush1.msra.mxu0 %v123
  %214 = vmatprep.subr.mxu0 %v128
  %215 = vmatpush1.msra.mxu0 %v127
  %216 = vmatprep.subr.mxu0 %v132
  %217 = vmatpush1.msra.mxu0 %v131
  %218 = vmatprep.subr.mxu0 %v136
  %219 = vmatpush1.msra.mxu0 %v135
  %220 = vmatprep.subr.mxu0 %v140
  %221 = vmatpush1.msra.mxu0 %v139
  %222 = vmatprep.subr.mxu0 %v144
  %223 = vmatpush1.msra.mxu0 %v143
  %224 = vmatprep.subr.mxu0 %v148
  %225 = vmatpush1.msra.mxu0 %v147
  %226 = vmatprep.subr.mxu0 %v152
  %227 = vmatpush1.msra.mxu0 %v151
  %228 = vmatprep.subr.mxu0 %v156
  %229 = vmatpush1.msra.mxu0 %v155
  %230 = vmatprep.subr.mxu0 %v160
  %231 = vmatpush1.msra.mxu0 %v159
  %232 = vmatprep.subr.mxu0 %v164
  %233 = vmatpush1.msra.mxu0 %v163
  %234 = vmatprep.mubr.f32.mxu0 %v168
  %235 = vmatmul.mubr.f32.gmra.mrb[0].mxu0 %v38
  %v236 = vpop.f32.mrb[0].mxu0
  %v237 = vadd.f32 0.0, %v236
  %v238 = vpop.f32.mrb[0].mxu0
  %v239 = vadd.f32 0.0, %v238
  %240 = vdwg.mxu0
  %241 = vmatprep.subr.mxu0 %v42
  %242 = vmatpush1.msra.mxu0 %v41
  %243 = vmatprep.subr.mxu0 %v46
  %244 = vmatpush1.msra.mxu0 %v45
  %245 = vmatprep.subr.mxu0 %v50
  %246 = vmatpush1.msra.mxu0 %v49
  %247 = vmatprep.subr.mxu0 %v54
  %248 = vmatpush1.msra.mxu0 %v53
  %249 = vmatprep.subr.mxu0 %v58
  %250 = vmatpush1.msra.mxu0 %v57
  %251 = vmatprep.subr.mxu0 %v62
  %252 = vmatpush1.msra.mxu0 %v61
  %253 = vmatprep.subr.mxu0 %v66
  %254 = vmatpush1.msra.mxu0 %v65
  %255 = vmatprep.subr.mxu0 %v70
  %256 = vmatpush1.msra.mxu0 %v69
  %257 = vmatprep.subr.mxu0 %v74
  %258 = vmatpush1.msra.mxu0 %v73
  %259 = vmatprep.subr.mxu0 %v78
  %260 = vmatpush1.msra.mxu0 %v77
  %261 = vmatprep.subr.mxu0 %v82
  %262 = vmatpush1.msra.mxu0 %v81
  %263 = vmatprep.subr.mxu0 %v86
  %264 = vmatpush1.msra.mxu0 %v85
  %265 = vmatprep.subr.mxu0 %v90
  %266 = vmatpush1.msra.mxu0 %v89
  %267 = vmatprep.subr.mxu0 %v94
  %268 = vmatpush1.msra.mxu0 %v93
  %269 = vmatprep.subr.mxu0 %v98
  %270 = vmatpush1.msra.mxu0 %v97
  %271 = vmatprep.subr.mxu0 %v102
  %272 = vmatpush1.msra.mxu0 %v101
  %273 = vmatprep.subr.mxu0 %v106
  %274 = vmatpush1.msra.mxu0 %v105
  %275 = vmatprep.subr.mxu0 %v110
  %276 = vmatpush1.msra.mxu0 %v109
  %277 = vmatprep.subr.mxu0 %v114
  %278 = vmatpush1.msra.mxu0 %v113
  %279 = vmatprep.subr.mxu0 %v118
  %280 = vmatpush1.msra.mxu0 %v117
  %281 = vmatprep.subr.mxu0 %v122
  %282 = vmatpush1.msra.mxu0 %v121
  %283 = vmatprep.subr.mxu0 %v126
  %284 = vmatpush1.msra.mxu0 %v125
  %285 = vmatprep.subr.mxu0 %v130
  %286 = vmatpush1.msra.mxu0 %v129
  %287 = vmatprep.subr.mxu0 %v134
  %288 = vmatpush1.msra.mxu0 %v133
  %289 = vmatprep.subr.mxu0 %v138
  %290 = vmatpush1.msra.mxu0 %v137
  %291 = vmatprep.subr.mxu0 %v142
  %292 = vmatpush1.msra.mxu0 %v141
  %293 = vmatprep.subr.mxu0 %v146
  %294 = vmatpush1.msra.mxu0 %v145
  %295 = vmatprep.subr.mxu0 %v150
  %296 = vmatpush1.msra.mxu0 %v149
  %297 = vmatprep.subr.mxu0 %v154
  %298 = vmatpush1.msra.mxu0 %v153
  %299 = vmatprep.subr.mxu0 %v158
  %300 = vmatpush1.msra.mxu0 %v157
  %301 = vmatprep.subr.mxu0 %v162
  %302 = vmatpush1.msra.mxu0 %v161
  %303 = vmatprep.subr.mxu0 %v166
  %304 = vmatpush1.msra.mxu0 %v165
  %305 = vmatprep.mubr.f32.mxu0 %v168
  %306 = vmatmul.mubr.f32.gmra.mrb[0].mxu0 %v38
  %v307 = vpop.f32.mrb[0].mxu0
  %v308 = vadd.f32 0.0, %v307
  %v309 = vpop.f32.mrb[0].mxu0
  %v310 = vadd.f32 0.0, %v309
  %311 = vdwg.mxu0
  %v316 = vcombine.low %v237, %v239
  %v317 = vcombine.low %v308, %v310
  %v320 = vadd.f32 %v36, %v316
  %v321 = vadd.f32 %v37, %v317
  %322 = vst [vmem:[#allocation2] sm:$0xff] %v320
  %323 = vst [vmem:[#allocation2 + $0x8] sm:$0xff] %v321
  // Predicated region
  $region18: #{frru_forward.8} parent=0 // pred_check
    %p324 = pneg %p14
  $region19: #{frru_forward.8} parent=0 // pred_check_branch
    %326 = sbr.rel (%p324) target = $region21
  $region20: #{frru_forward.8} parent=0 // pred_region
    %v327 = vld [vmem:[#allocation2] sm:$0xff]
    %v328 = vld [vmem:[#allocation2 + $0x8] sm:$0xff]
    %329 = vst [vmem:[%s3] sm:$0xff] %v327
    %330 = vst [vmem:[%s3 + $0x8] sm:$0xff] %v328
  $region21: #{frru_forward.8} parent=0 // pred_fallthru
    _
  // Predicated region
  $region22: #{frru_forward.8} parent=0 // pred_check
    _
  $region23: #{frru_forward.8} parent=0 // pred_check_branch
    %332 = sbr.rel (0) target = $region25
  $region24: #{frru_forward.8} parent=0 // pred_region
    _
  $region25: #{frru_forward.8} parent=0 // pred_fallthru
    _
  // Predicated region
  $region26: #{frru_forward.8} parent=0 // pred_check
    _
  $region27: #{frru_forward.8} parent=0 // pred_check_branch
    %334 = sbr.rel (0) target = $region29
  $region28: #{frru_forward.8} parent=0 // pred_region
    _
  $region29: #{frru_forward.8} parent=0 // pred_fallthru
    _

// kernel: frru_forward.9
$region0: #{frru_forward.9}
  #allocation0 [shape = 'u32[]', space=smem, size = 0x4, offset = 0x4, fixed_abs, tag = 'smem constant byte address 0x4 - core index']
  #allocation1 [shape = 'u32[144,128]{1,0:T(1,128)}', space=vmem, size = 0x12000, scoped, tag = 'internal scratch']
  %s0 = inlined_call_operand.vmem [shape: f32[64,128], index: 0, kind: input, shape index: {}]
  %s1 = inlined_call_operand.vmem [shape: f32[64,128], index: 1, kind: input, shape index: {}]
  %s2 = inlined_call_operand.vmem [shape: f32[64,128], index: 2, kind: output, shape index: {}]
  %s3 = sld [smem:[#allocation0]]
  $region18: #{frru_forward.9} parent=0
    _
  %s5 = ssub.s32 1, %s3
  %s6 = scalar_select 0, %s5, %s3
  // Predicated region
  $region2: #{frru_forward.9} parent=0 // pred_check
    _
  $region3: #{frru_forward.9} parent=0 // pred_check_branch
    %8 = sbr.rel (0) target = $region5
  $region4: #{frru_forward.9} parent=0 // pred_region
    _
  $region5: #{frru_forward.9} parent=0 // pred_fallthru
    _
  // Predicated region
  $region6: #{frru_forward.9} parent=0 // pred_check
    _
  $region7: #{frru_forward.9} parent=0 // pred_check_branch
    %10 = sbr.rel (0) target = $region9
  $region8: #{frru_forward.9} parent=0 // pred_region
    _
  $region9: #{frru_forward.9} parent=0 // pred_fallthru
    _
  %v11 = vld [vmem:[%s0] sm:$0xff]
  %v12 = vld [vmem:[%s0 + $0x8] sm:$0xff]
  %v13 = vld [vmem:[%s0 + $0x10] sm:$0xff]
  %v14 = vld [vmem:[%s0 + $0x18] sm:$0xff]
  %v15 = vld [vmem:[%s0 + $0x20] sm:$0xff]
  %v16 = vld [vmem:[%s0 + $0x28] sm:$0xff]
  %v17 = vld [vmem:[%s0 + $0x30] sm:$0xff]
  %v18 = vld [vmem:[%s0 + $0x38] sm:$0xff]
  %v19 = vld [vmem:[%s1] sm:$0xff]
  %v20 = vld [vmem:[%s1 + $0x8] sm:$0xff]
  %v21 = vld [vmem:[%s1 + $0x10] sm:$0xff]
  %v22 = vld [vmem:[%s1 + $0x18] sm:$0xff]
  %v23 = vld [vmem:[%s1 + $0x20] sm:$0xff]
  %v24 = vld [vmem:[%s1 + $0x28] sm:$0xff]
  %v25 = vld [vmem:[%s1 + $0x30] sm:$0xff]
  %v26 = vld [vmem:[%s1 + $0x38] sm:$0xff]
  %v27 = vadd.f32 %v11, %v19
  %v28 = vadd.f32 %v12, %v20
  %v29 = vadd.f32 %v13, %v21
  %v30 = vadd.f32 %v14, %v22
  %v31 = vadd.f32 %v15, %v23
  %v32 = vadd.f32 %v16, %v24
  %v33 = vadd.f32 %v17, %v25
  %v34 = vadd.f32 %v18, %v26
  %35 = vst [vmem:[%s2] sm:$0xff] %v27
  %36 = vst [vmem:[%s2 + $0x8] sm:$0xff] %v28
  %37 = vst [vmem:[%s2 + $0x10] sm:$0xff] %v29
  %38 = vst [vmem:[%s2 + $0x18] sm:$0xff] %v30
  %39 = vst [vmem:[%s2 + $0x20] sm:$0xff] %v31
  %40 = vst [vmem:[%s2 + $0x28] sm:$0xff] %v32
  %41 = vst [vmem:[%s2 + $0x30] sm:$0xff] %v33
  %42 = vst [vmem:[%s2 + $0x38] sm:$0xff] %v34
  // Predicated region
  $region10: #{frru_forward.9} parent=0 // pred_check
    _
  $region11: #{frru_forward.9} parent=0 // pred_check_branch
    %44 = sbr.rel (0) target = $region13
  $region12: #{frru_forward.9} parent=0 // pred_region
    _
  $region13: #{frru_forward.9} parent=0 // pred_fallthru
    _
  // Predicated region
  $region14: #{frru_forward.9} parent=0 // pred_check
    _
  $region15: #{frru_forward.9} parent=0 // pred_check_branch
    %46 = sbr.rel (0) target = $region17
  $region16: #{frru_forward.9} parent=0 // pred_region
    _
  $region17: #{frru_forward.9} parent=0 // pred_fallthru
    _

</llo_original>
